<compile_context>
chip_gen: v6e
topology: v6e:2x2x1
jax: 0.10.0
libtpu: 0.0.40
codegen_flags: <defaults>
</compile_context>

<pallas_src>
import functools

import jax
import jax.numpy as jnp
from jax.experimental import pallas as pl
from jax.experimental.pallas import tpu as pltpu

NEG_SLOPE = 0.01   # torch.nn.LeakyReLU default
EPS = 1e-5         # torch BatchNorm default eps


# ---------------------------------------------------------------------------
# Fused kernel: conv(+folded BN) + LeakyReLU + max-pool(T) + MLP head
# ---------------------------------------------------------------------------
def fused_kernel(emb_ref, cw_ref, cb_ref, w1_ref, b1_ref, w2_ref, b2_ref,
                 w3_ref, b3_ref, o_ref):
    # emb_ref: (B, L, E) bf16          cw_ref: (W, E, F) bf16   cb_ref: (1, F) f32
    # w1_ref:  (F, 512) bf16 b1:(1,512) w2:(512,256) bf16 b2:(1,256)
    # w3_ref:  (1, 256) f32  b3:(1,1)   o_ref: (B, 128) f32 lane-dense slab
    B, L, E = emb_ref.shape
    W, _, F = cw_ref.shape
    T = L - W + 1   # wrapper guarantees T % 8 == 0 (sublane-aligned reshapes)

    # Conv2d(1->F, kernel (W,E)) as W shifted matmuls, batch folded into M.
    acc = jnp.zeros((B * T, F), jnp.float32)
    for w in range(W):
        x_w = emb_ref[:, w:w + T, :].reshape(B * T, E)          # bf16 (B*T, E)
        acc = acc + jnp.dot(x_w, cw_ref[w],
                            preferred_element_type=jnp.float32)
    s = acc + cb_ref[...]                    # conv bias + folded BN_emb/BN_conv
    s = jnp.where(s > 0, s, NEG_SLOPE * s)   # LeakyReLU (f32 on VPU)

    # MaxPool2d over the T valid time steps -> (B, F)
    feat = jnp.max(s.reshape(B, T, F), axis=1)

    # MLP head (BatchNorm1d(1) folded into linear1/linear2; dropout = identity)
    h1 = jnp.dot(feat.astype(jnp.bfloat16), w1_ref[...],
                 preferred_element_type=jnp.float32) + b1_ref[...]
    h1 = jnp.where(h1 > 0, h1, NEG_SLOPE * h1)
    h2 = jnp.dot(h1.astype(jnp.bfloat16), w2_ref[...],
                 preferred_element_type=jnp.float32) + b2_ref[...]
    h2 = jnp.where(h2 > 0, h2, NEG_SLOPE * h2)

    # linear3 (256 -> 1) as a VPU lane reduction (avoid N=1 MXU pass), sigmoid.
    z = jnp.sum(h2 * w3_ref[...], axis=-1, keepdims=True) + b3_ref[...]   # (B,1)
    y = jax.nn.sigmoid(z)

    # Lane-dense output; wrapper slices column 0.
    o_ref[...] = jnp.broadcast_to(y, o_ref.shape)


# ---------------------------------------------------------------------------
# Parameters (deterministic, synthetic — shapes match nn.Module __init__)
# ---------------------------------------------------------------------------
def init_params(key, *, bit_size, embedding_size, window_height, num_filter):
    ks = jax.random.split(key, 9)
    E, W, F = embedding_size, window_height, num_filter

    emb = 0.1 * jax.random.normal(ks[0], (bit_size + 1, E), jnp.float32)
    emb = emb.at[0].set(0.0)                               # padding_idx=0

    conv_w = jax.random.normal(ks[1], (F, 1, W, E), jnp.float32) / jnp.sqrt(W * E)
    conv_b = 0.01 * jax.random.normal(ks[2], (F,), jnp.float32)

    w1 = jax.random.normal(ks[3], (512, F), jnp.float32) / jnp.sqrt(F)  # torch (out,in)
    b1 = 0.01 * jax.random.normal(ks[4], (512,), jnp.float32)
    w2 = jax.random.normal(ks[5], (256, 512), jnp.float32) / jnp.sqrt(512)
    b2 = 0.01 * jax.random.normal(ks[6], (256,), jnp.float32)
    w3 = jax.random.normal(ks[7], (1, 256), jnp.float32) / jnp.sqrt(256)
    b3 = 0.01 * jax.random.normal(ks[8], (1,), jnp.float32)

    def bn(n):
        return dict(gamma=jnp.ones((n,), jnp.float32), beta=jnp.zeros((n,), jnp.float32),
                    mean=jnp.zeros((n,), jnp.float32), var=jnp.ones((n,), jnp.float32))

    return dict(emb=emb, conv_w=conv_w, conv_b=conv_b,
                w1=w1, b1=b1, w2=w2, b2=b2, w3=w3, b3=b3,
                bn_emb=bn(1), bn_c=bn(F), bn1=bn(1), bn2=bn(1))


def prepare_params(params):
    """Fold all eval-mode BatchNorms into adjacent matmul weights/biases and
    cast MXU operands to bf16.  Parameter-only; run once, outside jit."""
    E = params["emb"].shape[1]
    F, _, W, _ = params["conv_w"].shape

    # BatchNorm2d(1) on embeddings: scalar affine x -> s_e*x + c_e, folded into
    # the conv:  conv(s_e*x + c_e) = s_e*conv(x) + c_e*sum(conv_w).
    bne = params["bn_emb"]
    s_e = bne["gamma"][0] / jnp.sqrt(bne["var"][0] + EPS)
    c_e = bne["beta"][0] - bne["mean"][0] * s_e

    # BatchNorm2d(F) after conv: per-filter affine.
    bnc = params["bn_c"]
    s_c = bnc["gamma"] / jnp.sqrt(bnc["var"] + EPS)                        # (F,)

    cw = params["conv_w"].reshape(F, W, E)                                 # (F,W,E)
    wsum = jnp.sum(cw, axis=(1, 2))                                        # (F,)
    cw_folded = jnp.transpose(cw, (1, 2, 0)) * (s_e * s_c)[None, None, :]  # (W,E,F)
    cb_folded = ((params["conv_b"] + c_e * wsum) - bnc["mean"]) * s_c + bnc["beta"]

    def fold_linear(w, b, bn):           # w: torch layout (out, in)
        s = bn["gamma"][0] / jnp.sqrt(bn["var"][0] + EPS)
        return ((w.T * s).astype(jnp.bfloat16),
                (((b - bn["mean"][0]) * s) + bn["beta"][0])[None, :].astype(jnp.float32))

    w1, b1 = fold_linear(params["w1"], params["b1"], params["bn1"])   # (F,512),(1,512)
    w2, b2 = fold_linear(params["w2"], params["b2"], params["bn2"])   # (512,256),(1,256)

    return dict(
        emb=params["emb"].astype(jnp.bfloat16),          # gather outputs bf16 directly
        cw=cw_folded.astype(jnp.bfloat16),
        cb=cb_folded[None, :].astype(jnp.float32),
        w1=w1, b1=b1, w2=w2, b2=b2,
        w3=params["w3"].astype(jnp.float32),             # (1,256) row for VPU reduce
        b3=params["b3"][None, :].astype(jnp.float32),    # (1,1)
    )


# ---------------------------------------------------------------------------
# Forward: embedding gather in XLA, everything else in one Pallas call
# ---------------------------------------------------------------------------
def forward(fp, x, *, max_length, window_height):
    B = x.shape[0]
    L, W = max_length, window_height
    E = fp["emb"].shape[1]
    F = fp["cw"].shape[2]
    T = L - W + 1
    assert T % 8 == 0, "choose/pad max_length so that T = L - W + 1 is a multiple of 8"

    # Embedding lookup (row 0 is zero -> padding_idx semantics), (B, L, E) bf16.
    embeds = fp["emb"][x]

    flops = 2 * B * T * W * E * F + 2 * B * (F * 512 + 512 * 256 + 256)
    bytes_accessed = (embeds.size * 2 + fp["cw"].size * 2
                      + fp["w1"].size * 2 + fp["w2"].size * 2
                      + (fp["cb"].size + fp["b1"].size + fp["b2"].size
                         + fp["w3"].size + fp["b3"].size) * 4
                      + B * 128 * 4)

    out = pl.pallas_call(
        fused_kernel,
        out_shape=jax.ShapeDtypeStruct((B, 128), jnp.float32),
        in_specs=[pl.BlockSpec(memory_space=pltpu.MemorySpace.VMEM)] * 9,
        out_specs=pl.BlockSpec(memory_space=pltpu.MemorySpace.VMEM),
        cost_estimate=pl.CostEstimate(flops=flops, transcendentals=B,
                                      bytes_accessed=bytes_accessed),
    )(embeds, fp["cw"], fp["cb"], fp["w1"], fp["b1"],
      fp["w2"], fp["b2"], fp["w3"], fp["b3"])

    # TODO(synk): for large B, add a "parallel" batch grid axis so both v7x
    # TensorCores are used; at this size a single invocation is optimal.
    return out[:, :1].reshape(B, 1, 1)   # torch output shape (B, 1, 1)


if __name__ == "__main__":
    # Small, module-consistent hyperparameters (T = 20 - 5 + 1 = 16, 8-aligned).
    BIT_SIZE = 64
    EMBEDDING_SIZE = 128
    MAX_LENGTH = 20
    WINDOW_HEIGHT = 5
    NUM_FILTER = 256
    BATCH = 4

    key = jax.random.PRNGKey(0)
    pkey, xkey = jax.random.split(key)

    raw = init_params(pkey, bit_size=BIT_SIZE, embedding_size=EMBEDDING_SIZE,
                      window_height=WINDOW_HEIGHT, num_filter=NUM_FILTER)
    params = prepare_params(raw)   # BN folds + bf16 casts: once, outside jit

    # Token indices in [0, bit_size]; 0 is the padding index.
    x = jax.random.randint(xkey, (BATCH, MAX_LENGTH), 0, BIT_SIZE + 1, dtype=jnp.int32)

    fwd = jax.jit(functools.partial(forward, max_length=MAX_LENGTH,
                                    window_height=WINDOW_HEIGHT))
    y = fwd(params, x)
    jax.block_until_ready(y)

    assert y.shape == (BATCH, 1, 1)
    assert bool(jnp.all((y >= 0.0) & (y <= 1.0)))
    print("KERNEL_OK")
</pallas_src>

<mosaic_0001>
module attributes {stable_mosaic.version = 11 : i64} {
  func.func @fused_kernel(%arg0: memref<4x20x128xbf16, #tpu.memory_space<vmem>>, %arg1: memref<5x128x256xbf16, #tpu.memory_space<vmem>>, %arg2: memref<1x256xf32, #tpu.memory_space<vmem>>, %arg3: memref<256x512xbf16, #tpu.memory_space<vmem>>, %arg4: memref<1x512xf32, #tpu.memory_space<vmem>>, %arg5: memref<512x256xbf16, #tpu.memory_space<vmem>>, %arg6: memref<1x256xf32, #tpu.memory_space<vmem>>, %arg7: memref<1x256xf32, #tpu.memory_space<vmem>>, %arg8: memref<1x1xf32, #tpu.memory_space<vmem>>, %arg9: memref<4x128xf32, #tpu.memory_space<vmem>>) attributes {dimension_semantics = [], scalar_prefetch = 0 : i64, scratch_operands = 0 : i64, tpu.core_type = #tpu.core_type<tc>} {
    %cst = arith.constant 0.000000e+00 : f32
    %0 = vector.broadcast %cst : f32 to vector<64x256xf32>
    %c0 = arith.constant 0 : index
    %c0_0 = arith.constant 0 : index
    %c0_1 = arith.constant 0 : index
    %1 = vector.load %arg0[%c0, %c0_0, %c0_1] : memref<4x20x128xbf16, #tpu.memory_space<vmem>>, vector<4x16x128xbf16>
    %2 = vector.shape_cast %1 : vector<4x16x128xbf16> to vector<64x128xbf16>
    %c0_2 = arith.constant 0 : index
    %c0_3 = arith.constant 0 : index
    %c0_4 = arith.constant 0 : index
    %3 = vector.load %arg1[%c0_2, %c0_3, %c0_4] : memref<5x128x256xbf16, #tpu.memory_space<vmem>>, vector<1x128x256xbf16>
    %4 = vector.shape_cast %3 : vector<1x128x256xbf16> to vector<128x256xbf16>
    %cst_5 = arith.constant dense<0.000000e+00> : vector<64x256xf32>
    %5 = tpu.matmul %2, %4, %cst_5 {dimension_numbers = #tpu.dot_dimension_numbers<[1], [0], [0], [1], [0, 0, 1, 1], [], []>} : vector<64x128xbf16>, vector<128x256xbf16>, vector<64x256xf32> -> vector<64x256xf32>
    %6 = arith.addf %0, %5 : vector<64x256xf32>
    %c0_6 = arith.constant 0 : index
    %c1 = arith.constant 1 : index
    %c0_7 = arith.constant 0 : index
    %7 = vector.load %arg0[%c0_6, %c1, %c0_7] : memref<4x20x128xbf16, #tpu.memory_space<vmem>>, vector<4x16x128xbf16>
    %8 = vector.shape_cast %7 : vector<4x16x128xbf16> to vector<64x128xbf16>
    %c1_8 = arith.constant 1 : index
    %c0_9 = arith.constant 0 : index
    %c0_10 = arith.constant 0 : index
    %9 = vector.load %arg1[%c1_8, %c0_9, %c0_10] : memref<5x128x256xbf16, #tpu.memory_space<vmem>>, vector<1x128x256xbf16>
    %10 = vector.shape_cast %9 : vector<1x128x256xbf16> to vector<128x256xbf16>
    %cst_11 = arith.constant dense<0.000000e+00> : vector<64x256xf32>
    %11 = tpu.matmul %8, %10, %cst_11 {dimension_numbers = #tpu.dot_dimension_numbers<[1], [0], [0], [1], [0, 0, 1, 1], [], []>} : vector<64x128xbf16>, vector<128x256xbf16>, vector<64x256xf32> -> vector<64x256xf32>
    %12 = arith.addf %6, %11 : vector<64x256xf32>
    %c0_12 = arith.constant 0 : index
    %c2 = arith.constant 2 : index
    %c0_13 = arith.constant 0 : index
    %13 = vector.load %arg0[%c0_12, %c2, %c0_13] : memref<4x20x128xbf16, #tpu.memory_space<vmem>>, vector<4x16x128xbf16>
    %14 = vector.shape_cast %13 : vector<4x16x128xbf16> to vector<64x128xbf16>
    %c2_14 = arith.constant 2 : index
    %c0_15 = arith.constant 0 : index
    %c0_16 = arith.constant 0 : index
    %15 = vector.load %arg1[%c2_14, %c0_15, %c0_16] : memref<5x128x256xbf16, #tpu.memory_space<vmem>>, vector<1x128x256xbf16>
    %16 = vector.shape_cast %15 : vector<1x128x256xbf16> to vector<128x256xbf16>
    %cst_17 = arith.constant dense<0.000000e+00> : vector<64x256xf32>
    %17 = tpu.matmul %14, %16, %cst_17 {dimension_numbers = #tpu.dot_dimension_numbers<[1], [0], [0], [1], [0, 0, 1, 1], [], []>} : vector<64x128xbf16>, vector<128x256xbf16>, vector<64x256xf32> -> vector<64x256xf32>
    %18 = arith.addf %12, %17 : vector<64x256xf32>
    %c0_18 = arith.constant 0 : index
    %c3 = arith.constant 3 : index
    %c0_19 = arith.constant 0 : index
    %19 = vector.load %arg0[%c0_18, %c3, %c0_19] : memref<4x20x128xbf16, #tpu.memory_space<vmem>>, vector<4x16x128xbf16>
    %20 = vector.shape_cast %19 : vector<4x16x128xbf16> to vector<64x128xbf16>
    %c3_20 = arith.constant 3 : index
    %c0_21 = arith.constant 0 : index
    %c0_22 = arith.constant 0 : index
    %21 = vector.load %arg1[%c3_20, %c0_21, %c0_22] : memref<5x128x256xbf16, #tpu.memory_space<vmem>>, vector<1x128x256xbf16>
    %22 = vector.shape_cast %21 : vector<1x128x256xbf16> to vector<128x256xbf16>
    %cst_23 = arith.constant dense<0.000000e+00> : vector<64x256xf32>
    %23 = tpu.matmul %20, %22, %cst_23 {dimension_numbers = #tpu.dot_dimension_numbers<[1], [0], [0], [1], [0, 0, 1, 1], [], []>} : vector<64x128xbf16>, vector<128x256xbf16>, vector<64x256xf32> -> vector<64x256xf32>
    %24 = arith.addf %18, %23 : vector<64x256xf32>
    %c0_24 = arith.constant 0 : index
    %c4 = arith.constant 4 : index
    %c0_25 = arith.constant 0 : index
    %25 = vector.load %arg0[%c0_24, %c4, %c0_25] : memref<4x20x128xbf16, #tpu.memory_space<vmem>>, vector<4x16x128xbf16>
    %26 = vector.shape_cast %25 : vector<4x16x128xbf16> to vector<64x128xbf16>
    %c4_26 = arith.constant 4 : index
    %c0_27 = arith.constant 0 : index
    %c0_28 = arith.constant 0 : index
    %27 = vector.load %arg1[%c4_26, %c0_27, %c0_28] : memref<5x128x256xbf16, #tpu.memory_space<vmem>>, vector<1x128x256xbf16>
    %28 = vector.shape_cast %27 : vector<1x128x256xbf16> to vector<128x256xbf16>
    %cst_29 = arith.constant dense<0.000000e+00> : vector<64x256xf32>
    %29 = tpu.matmul %26, %28, %cst_29 {dimension_numbers = #tpu.dot_dimension_numbers<[1], [0], [0], [1], [0, 0, 1, 1], [], []>} : vector<64x128xbf16>, vector<128x256xbf16>, vector<64x256xf32> -> vector<64x256xf32>
    %30 = arith.addf %24, %29 : vector<64x256xf32>
    %c0_30 = arith.constant 0 : index
    %c0_31 = arith.constant 0 : index
    %31 = vector.load %arg2[%c0_30, %c0_31] : memref<1x256xf32, #tpu.memory_space<vmem>>, vector<1x256xf32>
    %32 = vector.broadcast %31 : vector<1x256xf32> to vector<64x256xf32>
    %33 = arith.addf %30, %32 : vector<64x256xf32>
    %cst_32 = arith.constant 0.000000e+00 : f32
    %34 = vector.broadcast %cst_32 : f32 to vector<64x256xf32>
    %35 = arith.cmpf ogt, %33, %34 : vector<64x256xf32>
    %cst_33 = arith.constant 0.00999999977 : f32
    %36 = vector.broadcast %cst_33 : f32 to vector<64x256xf32>
    %37 = arith.mulf %36, %33 : vector<64x256xf32>
    %38 = arith.select %35, %33, %37 : vector<64x256xi1>, vector<64x256xf32>
    %39 = vector.shape_cast %38 : vector<64x256xf32> to vector<4x16x256xf32>
    %cst_34 = arith.constant dense<0xFF800000> : vector<4x256xf32>
    %40 = vector.multi_reduction <maximumf>, %39, %cst_34 [1] : vector<4x16x256xf32> to vector<4x256xf32>
    %41 = arith.truncf %40 : vector<4x256xf32> to vector<4x256xbf16>
    %c0_35 = arith.constant 0 : index
    %c0_36 = arith.constant 0 : index
    %42 = vector.load %arg3[%c0_35, %c0_36] : memref<256x512xbf16, #tpu.memory_space<vmem>>, vector<256x512xbf16>
    %cst_37 = arith.constant dense<0.000000e+00> : vector<4x512xf32>
    %43 = tpu.matmul %41, %42, %cst_37 {dimension_numbers = #tpu.dot_dimension_numbers<[1], [0], [0], [1], [0, 0, 1, 1], [], []>} : vector<4x256xbf16>, vector<256x512xbf16>, vector<4x512xf32> -> vector<4x512xf32>
    %c0_38 = arith.constant 0 : index
    %c0_39 = arith.constant 0 : index
    %44 = vector.load %arg4[%c0_38, %c0_39] : memref<1x512xf32, #tpu.memory_space<vmem>>, vector<1x512xf32>
    %45 = vector.broadcast %44 : vector<1x512xf32> to vector<4x512xf32>
    %46 = arith.addf %43, %45 : vector<4x512xf32>
    %cst_40 = arith.constant 0.000000e+00 : f32
    %47 = vector.broadcast %cst_40 : f32 to vector<4x512xf32>
    %48 = arith.cmpf ogt, %46, %47 : vector<4x512xf32>
    %cst_41 = arith.constant 0.00999999977 : f32
    %49 = vector.broadcast %cst_41 : f32 to vector<4x512xf32>
    %50 = arith.mulf %49, %46 : vector<4x512xf32>
    %51 = arith.select %48, %46, %50 : vector<4x512xi1>, vector<4x512xf32>
    %52 = arith.truncf %51 : vector<4x512xf32> to vector<4x512xbf16>
    %c0_42 = arith.constant 0 : index
    %c0_43 = arith.constant 0 : index
    %53 = vector.load %arg5[%c0_42, %c0_43] : memref<512x256xbf16, #tpu.memory_space<vmem>>, vector<512x256xbf16>
    %cst_44 = arith.constant dense<0.000000e+00> : vector<4x256xf32>
    %54 = tpu.matmul %52, %53, %cst_44 {dimension_numbers = #tpu.dot_dimension_numbers<[1], [0], [0], [1], [0, 0, 1, 1], [], []>} : vector<4x512xbf16>, vector<512x256xbf16>, vector<4x256xf32> -> vector<4x256xf32>
    %c0_45 = arith.constant 0 : index
    %c0_46 = arith.constant 0 : index
    %55 = vector.load %arg6[%c0_45, %c0_46] : memref<1x256xf32, #tpu.memory_space<vmem>>, vector<1x256xf32>
    %56 = vector.broadcast %55 : vector<1x256xf32> to vector<4x256xf32>
    %57 = arith.addf %54, %56 : vector<4x256xf32>
    %cst_47 = arith.constant 0.000000e+00 : f32
    %58 = vector.broadcast %cst_47 : f32 to vector<4x256xf32>
    %59 = arith.cmpf ogt, %57, %58 : vector<4x256xf32>
    %cst_48 = arith.constant 0.00999999977 : f32
    %60 = vector.broadcast %cst_48 : f32 to vector<4x256xf32>
    %61 = arith.mulf %60, %57 : vector<4x256xf32>
    %62 = arith.select %59, %57, %61 : vector<4x256xi1>, vector<4x256xf32>
    %c0_49 = arith.constant 0 : index
    %c0_50 = arith.constant 0 : index
    %63 = vector.load %arg7[%c0_49, %c0_50] : memref<1x256xf32, #tpu.memory_space<vmem>>, vector<1x256xf32>
    %64 = vector.broadcast %63 : vector<1x256xf32> to vector<4x256xf32>
    %65 = arith.mulf %62, %64 : vector<4x256xf32>
    %cst_51 = arith.constant dense<0.000000e+00> : vector<4xf32>
    %66 = vector.multi_reduction <add>, %65, %cst_51 [1] : vector<4x256xf32> to vector<4xf32>
    %67 = vector.shape_cast %66 : vector<4xf32> to vector<4x1xf32>
    %c0_52 = arith.constant 0 : index
    %c0_53 = arith.constant 0 : index
    %68 = vector.load %arg8[%c0_52, %c0_53] : memref<1x1xf32, #tpu.memory_space<vmem>>, vector<1x1xf32>
    %69 = vector.broadcast %68 : vector<1x1xf32> to vector<4x1xf32>
    %70 = arith.addf %67, %69 : vector<4x1xf32>
    %71 = arith.negf %70 : vector<4x1xf32>
    %72 = math.exp %71 : vector<4x1xf32>
    %cst_54 = arith.constant 1.000000e+00 : f32
    %73 = vector.broadcast %cst_54 : f32 to vector<4x1xf32>
    %74 = arith.addf %73, %72 : vector<4x1xf32>
    %75 = arith.divf %73, %74 : vector<4x1xf32>
    %76 = vector.shape_cast %75 : vector<4x1xf32> to vector<4x1xf32>
    %77 = vector.broadcast %76 : vector<4x1xf32> to vector<4x128xf32>
    %c0_55 = arith.constant 0 : index
    %c0_56 = arith.constant 0 : index
    %78 = vector.load %arg9[%c0_55, %c0_56] : memref<4x128xf32, #tpu.memory_space<vmem>>, vector<4x128xf32>
    tpu.vector_store %arg9[%c0_55, %c0_56], %77 {strides = array<i32>} : memref<4x128xf32, #tpu.memory_space<vmem>>, vector<4x128xf32>,
    return
  }
}

</mosaic_0001>

<llo_original>
// kernel: forward.1
$region0: #{forward.1}
  #allocation0 [shape = 'u32[]', space=smem, size = 0x4, offset = 0x4, fixed_abs, tag = 'smem constant byte address 0x4 - core index']
  #allocation1 [shape = 'u32[144,128]{1,0:T(1,128)}', space=vmem, size = 0x12000, scoped, tag = 'internal scratch']
  #allocation2 [shape = 'f32[1,1]{1,0:T(1,128)S(1)}', space=vmem, size = 0x200, scoped, tag = 'scoped memory for forward.1']
  %s0 = inlined_call_operand.vmem [shape: bf16[4,20,128], index: 0, kind: input, shape index: {}]
  %s1 = inlined_call_operand.hbm [shape: bf16[5,128,256], index: 1, kind: input, shape index: {}]
  %s2 = inlined_call_operand.vmem [shape: f32[1,256], index: 2, kind: input, shape index: {}]
  %s3 = inlined_call_operand.vmem [shape: bf16[256,512], index: 3, kind: input, shape index: {}]
  %s4 = inlined_call_operand.vmem [shape: f32[1,512], index: 4, kind: input, shape index: {}]
  %s5 = inlined_call_operand.hbm [shape: bf16[512,256], index: 5, kind: input, shape index: {}]
  %s6 = inlined_call_operand.vmem [shape: f32[1,256], index: 6, kind: input, shape index: {}]
  %s7 = inlined_call_operand.vmem [shape: f32[1,256], index: 7, kind: input, shape index: {}]
  %s8 = inlined_call_operand.<no memory space> [shape: f32[1,1], index: 8, kind: input, shape index: {}]
  %s9 = inlined_call_operand.vmem [shape: f32[4,128], index: 9, kind: output, shape index: {}]
  %s10 = sld [smem:[#allocation0]]
  $region54: #{forward.1} parent=0
    _
  %s12 = ssub.s32 1, %s10
  %s13 = scalar_select 0, %s12, %s10
  %v14 = vstv %s8
  %15 = vst [vmem:[#allocation2] sm:$0x1] %v14
  $region1: #{forward.1} parent=0
    #allocation3 [shape = 'u8[327680]{0}', space=vmem, size = 0x50000, scoped, tag = 'input window, operand 1, single buffered']
    #allocation4 [shape = 's32[1]{0}', space=sflag, size = 0x4, scoped, tag = 'scoped memory for forward.1']
    #allocation5 [shape = 'u8[262144]{0}', space=vmem, size = 0x40000, scoped, tag = 'input window, operand 5, single buffered']
    #allocation6 [shape = 's32[1]{0}', space=sflag, size = 0x4, scoped, tag = 'scoped memory for forward.1']
    %16 = vsyncpa [#allocation4], 0
    %17 = vsyncpa [#allocation6], 0
    // Predicated region
    $region2: #{forward.1} parent=1 // pred_check
      _
    $region3: #{forward.1} parent=1 // pred_check_branch
      %19 = sbr.rel (0) target = $region5
    $region4: #{forward.1} parent=1 // pred_region
      _
    $region5: #{forward.1} parent=1 // pred_fallthru
      _
    // Predicated region
    $region6: #{forward.1} parent=1 // pred_check
      _
    $region7: #{forward.1} parent=1 // pred_check_branch
      %21 = sbr.rel (0) target = $region9
    $region8: #{forward.1} parent=1 // pred_region
      %s23 = ssub.s32 10240, 10240
      %24 = vsyncadd [#allocation4], %s23
      %s25 = sshll.u32 [#allocation3], 4
      %s26 = int_to_ptr.vmem [resolvable:$true] %s25
      %31 = dma.hbm_to_vmem [thread:$0]  %s1, 10240, %s26, [#allocation4], 128, 128, 8
    $region9: #{forward.1} parent=1 // pred_fallthru
      _
    // Predicated region
    $region10: #{forward.1} parent=1 // pred_check
      _
    $region11: #{forward.1} parent=1 // pred_check_branch
      %33 = sbr.rel (0) target = $region13
    $region12: #{forward.1} parent=1 // pred_region
      _
    $region13: #{forward.1} parent=1 // pred_fallthru
      _
    // Predicated region
    $region14: #{forward.1} parent=1 // pred_check
      _
    $region15: #{forward.1} parent=1 // pred_check_branch
      %35 = sbr.rel (0) target = $region17
    $region16: #{forward.1} parent=1 // pred_region
      _
    $region17: #{forward.1} parent=1 // pred_fallthru
      _
    // Predicated region
    $region18: #{forward.1} parent=1 // pred_check
      _
    $region19: #{forward.1} parent=1 // pred_check_branch
      %37 = sbr.rel (0) target = $region21
    $region20: #{forward.1} parent=1 // pred_region
      _
    $region21: #{forward.1} parent=1 // pred_fallthru
      _
    // Predicated region
    $region22: #{forward.1} parent=1 // pred_check
      _
    $region23: #{forward.1} parent=1 // pred_check_branch
      %39 = sbr.rel (0) target = $region25
    $region24: #{forward.1} parent=1 // pred_region
      %s41 = ssub.s32 8192, 8192
      %42 = vsyncadd [#allocation6], %s41
      %s43 = sshll.u32 [#allocation5], 4
      %s44 = int_to_ptr.vmem [resolvable:$true] %s43
      %49 = dma.hbm_to_vmem [thread:$0]  %s5, 8192, %s44, [#allocation6], 128, 128, 8
    $region25: #{forward.1} parent=1 // pred_fallthru
      _
    // Predicated region
    $region26: #{forward.1} parent=1 // pred_check
      _
    $region27: #{forward.1} parent=1 // pred_check_branch
      %51 = sbr.rel (0) target = $region29
    $region28: #{forward.1} parent=1 // pred_region
      _
    $region29: #{forward.1} parent=1 // pred_fallthru
      _
    // Predicated region
    $region30: #{forward.1} parent=1 // pred_check
      _
    $region31: #{forward.1} parent=1 // pred_check_branch
      %53 = sbr.rel (0) target = $region33
    $region32: #{forward.1} parent=1 // pred_region
      _
    $region33: #{forward.1} parent=1 // pred_fallthru
      _
    // Predicated region
    $region34: #{forward.1} parent=1 // pred_check
      _
    $region35: #{forward.1} parent=1 // pred_check_branch
      %55 = sbr.rel (0) target = $region37
    $region36: #{forward.1} parent=1 // pred_region
      _
    $region37: #{forward.1} parent=1 // pred_fallthru
      _
    // Predicated region
    $region38: #{forward.1} parent=1 // pred_check
      _
    $region39: #{forward.1} parent=1 // pred_check_branch
      %57 = sbr.rel (0) target = $region41
    $region40: #{forward.1} parent=1 // pred_region
      %58 = dma.done [#allocation4], 10240
    $region41: #{forward.1} parent=1 // pred_fallthru
      _
    // Predicated region
    $region42: #{forward.1} parent=1 // pred_check
      _
    $region43: #{forward.1} parent=1 // pred_check_branch
      %60 = sbr.rel (0) target = $region45
    $region44: #{forward.1} parent=1 // pred_region
      %61 = dma.done [#allocation6], 8192
    $region45: #{forward.1} parent=1 // pred_fallthru
      _
    %v63 = vld [vmem:[%s0] sm:$0xf]
    %v64 = vld [vmem:[%s0 + $0x4] sm:$0xf]
    %v65 = vld [vmem:[%s0 + $0xc] sm:$0xf]
    %v66 = vld [vmem:[%s0 + $0x10] sm:$0xf]
    %v67 = vld [vmem:[%s0 + $0x18] sm:$0xf]
    %v68 = vld [vmem:[%s0 + $0x1c] sm:$0xf]
    %v69 = vld [vmem:[%s0 + $0x24] sm:$0xf]
    %v70 = vld [vmem:[%s0 + $0x28] sm:$0xf]
    %v71 = vld [vmem:[#allocation3] sm:$0xff]
    %v72 = vld [vmem:[#allocation3 + $0x8] sm:$0xff]
    %v73 = vld [vmem:[#allocation3 + $0x10] sm:$0xff]
    %v74 = vld [vmem:[#allocation3 + $0x18] sm:$0xff]
    %v75 = vld [vmem:[#allocation3 + $0x20] sm:$0xff]
    %v76 = vld [vmem:[#allocation3 + $0x28] sm:$0xff]
    %v77 = vld [vmem:[#allocation3 + $0x30] sm:$0xff]
    %v78 = vld [vmem:[#allocation3 + $0x38] sm:$0xff]
    %v79 = vld [vmem:[#allocation3 + $0x40] sm:$0xff]
    %v80 = vld [vmem:[#allocation3 + $0x48] sm:$0xff]
    %v81 = vld [vmem:[#allocation3 + $0x50] sm:$0xff]
    %v82 = vld [vmem:[#allocation3 + $0x58] sm:$0xff]
    %v83 = vld [vmem:[#allocation3 + $0x60] sm:$0xff]
    %v84 = vld [vmem:[#allocation3 + $0x68] sm:$0xff]
    %v85 = vld [vmem:[#allocation3 + $0x70] sm:$0xff]
    %v86 = vld [vmem:[#allocation3 + $0x78] sm:$0xff]
    %v87 = vld [vmem:[%s0 + $0x8] sm:$0x1]
    %v88 = vld [vmem:[%s0 + $0x14] sm:$0x1]
    %v89 = vld [vmem:[%s0 + $0x20] sm:$0x1]
    %v90 = vld [vmem:[%s0 + $0x2c] sm:$0x1]
    %vm91 = vsmask.f32 3328
    %vm92 = vsmask.f32 7440
    %vm93 = vmor %vm91, %vm92
    %v95 = vshrl.u32 %v63, 16
    %v97 = vrot.slane %v95, 4
    %v98 = vshll.u32 %v63, 16
    %v100 = vrot.slane %v98, 5
    %v101 = vor.u32 %v97, %v100
    %v102 = vrot.slane %v101, 4
    %v104 = vshll.u32 %v64, 16
    %v106 = vrot.slane %v104, 5
    %v107 = vsel %vm93, %v102, %v106
    %v108 = vshrl.u32 %v64, 16
    %v110 = vrot.slane %v108, 4
    %v111 = vor.u32 %v110, %v106
    %v112 = vrot.slane %v111, 4
    %v114 = vshll.u32 %v87, 16
    %v116 = vrot.slane %v114, 5
    %v117 = vsel %vm93, %v112, %v116
    %v119 = vshrl.u32 %v65, 16
    %v121 = vrot.slane %v119, 4
    %v122 = vshll.u32 %v65, 16
    %v124 = vrot.slane %v122, 5
    %v125 = vor.u32 %v121, %v124
    %v126 = vrot.slane %v125, 4
    %v128 = vshll.u32 %v66, 16
    %v130 = vrot.slane %v128, 5
    %v131 = vsel %vm93, %v126, %v130
    %v132 = vshrl.u32 %v66, 16
    %v134 = vrot.slane %v132, 4
    %v135 = vor.u32 %v134, %v130
    %v136 = vrot.slane %v135, 4
    %v138 = vshll.u32 %v88, 16
    %v140 = vrot.slane %v138, 5
    %v141 = vsel %vm93, %v136, %v140
    %v143 = vshrl.u32 %v67, 16
    %v145 = vrot.slane %v143, 4
    %v146 = vshll.u32 %v67, 16
    %v148 = vrot.slane %v146, 5
    %v149 = vor.u32 %v145, %v148
    %v150 = vrot.slane %v149, 4
    %v152 = vshll.u32 %v68, 16
    %v154 = vrot.slane %v152, 5
    %v155 = vsel %vm93, %v150, %v154
    %v156 = vshrl.u32 %v68, 16
    %v158 = vrot.slane %v156, 4
    %v159 = vor.u32 %v158, %v154
    %v160 = vrot.slane %v159, 4
    %v162 = vshll.u32 %v89, 16
    %v164 = vrot.slane %v162, 5
    %v165 = vsel %vm93, %v160, %v164
    %v167 = vshrl.u32 %v69, 16
    %v169 = vrot.slane %v167, 4
    %v170 = vshll.u32 %v69, 16
    %v172 = vrot.slane %v170, 5
    %v173 = vor.u32 %v169, %v172
    %v174 = vrot.slane %v173, 4
    %v176 = vshll.u32 %v70, 16
    %v178 = vrot.slane %v176, 5
    %v179 = vsel %vm93, %v174, %v178
    %v180 = vshrl.u32 %v70, 16
    %v182 = vrot.slane %v180, 4
    %v183 = vor.u32 %v182, %v178
    %v184 = vrot.slane %v183, 4
    %v186 = vshll.u32 %v90, 16
    %v188 = vrot.slane %v186, 5
    %v189 = vsel %vm93, %v184, %v188
    %s190 = scalar_lea.vmem [#allocation3], 128
    %v191 = vld [vmem:[%s190] sm:$0xff]
    %v192 = vld [vmem:[%s190 + $0x8] sm:$0xff]
    %v193 = vld [vmem:[%s190 + $0x10] sm:$0xff]
    %v194 = vld [vmem:[%s190 + $0x18] sm:$0xff]
    %v195 = vld [vmem:[%s190 + $0x20] sm:$0xff]
    %v196 = vld [vmem:[%s190 + $0x28] sm:$0xff]
    %v197 = vld [vmem:[%s190 + $0x30] sm:$0xff]
    %v198 = vld [vmem:[%s190 + $0x38] sm:$0xff]
    %v199 = vld [vmem:[%s190 + $0x40] sm:$0xff]
    %v200 = vld [vmem:[%s190 + $0x48] sm:$0xff]
    %v201 = vld [vmem:[%s190 + $0x50] sm:$0xff]
    %v202 = vld [vmem:[%s190 + $0x58] sm:$0xff]
    %v203 = vld [vmem:[%s190 + $0x60] sm:$0xff]
    %v204 = vld [vmem:[%s190 + $0x68] sm:$0xff]
    %v205 = vld [vmem:[%s190 + $0x70] sm:$0xff]
    %v206 = vld [vmem:[%s190 + $0x78] sm:$0xff]
    %v207 = vunpack.c.l.b16 %v107
    %v208 = vunpack.c.l.b16 %v117
    %v209 = vunpack.c.l.b16 %v131
    %v210 = vunpack.c.l.b16 %v141
    %v211 = vunpack.c.l.b16 %v155
    %v212 = vunpack.c.l.b16 %v165
    %v213 = vunpack.c.l.b16 %v179
    %v214 = vunpack.c.l.b16 %v189
    %v215 = vpack.c.b16 %v208, %v207
    %v216 = vpack.c.b16 %v210, %v209
    %v217 = vpack.c.b16 %v212, %v211
    %v218 = vpack.c.b16 %v214, %v213
    %v239 = vunpack.c.l.b16 %v191
    %v240 = vunpack.c.h.b16 %v191
    %v241 = vunpack.c.l.b16 %v192
    %v242 = vunpack.c.h.b16 %v192
    %v243 = vunpack.c.l.b16 %v193
    %v244 = vunpack.c.h.b16 %v193
    %v245 = vunpack.c.l.b16 %v194
    %v246 = vunpack.c.h.b16 %v194
    %v247 = vunpack.c.l.b16 %v195
    %v248 = vunpack.c.h.b16 %v195
    %v249 = vunpack.c.l.b16 %v196
    %v250 = vunpack.c.h.b16 %v196
    %v251 = vunpack.c.l.b16 %v197
    %v252 = vunpack.c.h.b16 %v197
    %v253 = vunpack.c.l.b16 %v198
    %v254 = vunpack.c.h.b16 %v198
    %v255 = vunpack.c.l.b16 %v199
    %v256 = vunpack.c.h.b16 %v199
    %v257 = vunpack.c.l.b16 %v200
    %v258 = vunpack.c.h.b16 %v200
    %v259 = vunpack.c.l.b16 %v201
    %v260 = vunpack.c.h.b16 %v201
    %v261 = vunpack.c.l.b16 %v202
    %v262 = vunpack.c.h.b16 %v202
    %v263 = vunpack.c.l.b16 %v203
    %v264 = vunpack.c.h.b16 %v203
    %v265 = vunpack.c.l.b16 %v204
    %v266 = vunpack.c.h.b16 %v204
    %v267 = vunpack.c.l.b16 %v205
    %v268 = vunpack.c.h.b16 %v205
    %v269 = vunpack.c.l.b16 %v206
    %v270 = vunpack.c.h.b16 %v206
    %v271 = vpack.c.b16 %v241, %v239
    %v272 = vpack.c.b16 %v242, %v240
    %v273 = vpack.c.b16 %v245, %v243
    %v274 = vpack.c.b16 %v246, %v244
    %v275 = vpack.c.b16 %v249, %v247
    %v276 = vpack.c.b16 %v250, %v248
    %v277 = vpack.c.b16 %v253, %v251
    %v278 = vpack.c.b16 %v254, %v252
    %v279 = vpack.c.b16 %v257, %v255
    %v280 = vpack.c.b16 %v258, %v256
    %v281 = vpack.c.b16 %v261, %v259
    %v282 = vpack.c.b16 %v262, %v260
    %v283 = vpack.c.b16 %v265, %v263
    %v284 = vpack.c.b16 %v266, %v264
    %v285 = vpack.c.b16 %v269, %v267
    %v286 = vpack.c.b16 %v270, %v268
    %303 = vmatprep.subr.bf16.mxu0 %v286
    %304 = vmatpush1.bf16.msra.mxu0 %v285
    %305 = vmatprep.subr.bf16.mxu0 %v284
    %306 = vmatpush1.bf16.msra.mxu0 %v283
    %307 = vmatprep.subr.bf16.mxu0 %v282
    %308 = vmatpush1.bf16.msra.mxu0 %v281
    %309 = vmatprep.subr.bf16.mxu0 %v280
    %310 = vmatpush1.bf16.msra.mxu0 %v279
    %311 = vmatprep.subr.bf16.mxu0 %v278
    %312 = vmatpush1.bf16.msra.mxu0 %v277
    %313 = vmatprep.subr.bf16.mxu0 %v276
    %314 = vmatpush1.bf16.msra.mxu0 %v275
    %315 = vmatprep.subr.bf16.mxu0 %v274
    %316 = vmatpush1.bf16.msra.mxu0 %v273
    %317 = vmatprep.subr.bf16.mxu0 %v272
    %318 = vmatpush1.bf16.msra.mxu0 %v271
    %319 = vmatprep.subr.bf16.mxu0 0
    %320 = vmatpush2.bf16.msra.mxu0 0
    %321 = vmatprep.subr.bf16.mxu0 0
    %322 = vmatpush2.bf16.msra.mxu0 0
    %323 = vmatprep.subr.bf16.mxu0 0
    %324 = vmatpush2.bf16.msra.mxu0 0
    %325 = vmatprep.subr.bf16.mxu0 0
    %326 = vmatpush2.bf16.msra.mxu0 0
    %327 = vmatprep.subr.bf16.mxu0 0
    %328 = vmatpush2.bf16.msra.mxu0 0
    %329 = vmatprep.subr.bf16.mxu0 0
    %330 = vmatpush2.bf16.msra.mxu0 0
    %331 = vmatprep.subr.bf16.mxu0 0
    %332 = vmatpush2.bf16.msra.mxu0 0
    %333 = vmatprep.subr.bf16.mxu0 0
    %334 = vmatpush2.bf16.msra.mxu0 0
    %335 = vmatprep.mubr.bf16.mxu0 0
    %336 = vmatmul.mubr.bf16.gmra.mxu0 %v215
    %v337 = vpop.f32.mrf.mxu0
    %v338 = vadd.f32 0.0, %v337
    %v339 = vpop.f32.mrf.mxu0
    %v340 = vadd.f32 0.0, %v339
    %v341 = vpop.f32.mrf.mxu0
    %v342 = vadd.f32 0.0, %v341
    %v343 = vpop.f32.mrf.mxu0
    %v344 = vadd.f32 0.0, %v343
    %345 = vmatprep.mubr.bf16.mxu0 0
    %346 = vmatmul.mubr.bf16.gmra.mxu0 %v216
    %v347 = vpop.f32.mrf.mxu0
    %v348 = vadd.f32 0.0, %v347
    %v349 = vpop.f32.mrf.mxu0
    %v350 = vadd.f32 0.0, %v349
    %v351 = vpop.f32.mrf.mxu0
    %v352 = vadd.f32 0.0, %v351
    %v353 = vpop.f32.mrf.mxu0
    %v354 = vadd.f32 0.0, %v353
    %355 = vmatprep.mubr.bf16.mxu0 0
    %356 = vmatmul.mubr.bf16.gmra.mxu0 %v217
    %v357 = vpop.f32.mrf.mxu0
    %v358 = vadd.f32 0.0, %v357
    %v359 = vpop.f32.mrf.mxu0
    %v360 = vadd.f32 0.0, %v359
    %v361 = vpop.f32.mrf.mxu0
    %v362 = vadd.f32 0.0, %v361
    %v363 = vpop.f32.mrf.mxu0
    %v364 = vadd.f32 0.0, %v363
    %365 = vmatprep.mubr.bf16.mxu0 0
    %366 = vmatmul.mubr.bf16.gmra.mxu0 %v218
    %v367 = vpop.f32.mrf.mxu0
    %v368 = vadd.f32 0.0, %v367
    %v369 = vpop.f32.mrf.mxu0
    %v370 = vadd.f32 0.0, %v369
    %v371 = vpop.f32.mrf.mxu0
    %v372 = vadd.f32 0.0, %v371
    %v373 = vpop.f32.mrf.mxu0
    %v374 = vadd.f32 0.0, %v373
    %375 = vdwg.mxu0
    %v384 = vunpack.c.l.b16 %v63
    %v385 = vunpack.c.l.b16 %v64
    %v386 = vunpack.c.l.b16 %v65
    %v387 = vunpack.c.l.b16 %v66
    %v388 = vunpack.c.l.b16 %v67
    %v389 = vunpack.c.l.b16 %v68
    %v390 = vunpack.c.l.b16 %v69
    %v391 = vunpack.c.l.b16 %v70
    %v392 = vpack.c.b16 %v385, %v384
    %v393 = vpack.c.b16 %v387, %v386
    %v394 = vpack.c.b16 %v389, %v388
    %v395 = vpack.c.b16 %v391, %v390
    %v416 = vunpack.c.l.b16 %v71
    %v417 = vunpack.c.h.b16 %v71
    %v418 = vunpack.c.l.b16 %v72
    %v419 = vunpack.c.h.b16 %v72
    %v420 = vunpack.c.l.b16 %v73
    %v421 = vunpack.c.h.b16 %v73
    %v422 = vunpack.c.l.b16 %v74
    %v423 = vunpack.c.h.b16 %v74
    %v424 = vunpack.c.l.b16 %v75
    %v425 = vunpack.c.h.b16 %v75
    %v426 = vunpack.c.l.b16 %v76
    %v427 = vunpack.c.h.b16 %v76
    %v428 = vunpack.c.l.b16 %v77
    %v429 = vunpack.c.h.b16 %v77
    %v430 = vunpack.c.l.b16 %v78
    %v431 = vunpack.c.h.b16 %v78
    %v432 = vunpack.c.l.b16 %v79
    %v433 = vunpack.c.h.b16 %v79
    %v434 = vunpack.c.l.b16 %v80
    %v435 = vunpack.c.h.b16 %v80
    %v436 = vunpack.c.l.b16 %v81
    %v437 = vunpack.c.h.b16 %v81
    %v438 = vunpack.c.l.b16 %v82
    %v439 = vunpack.c.h.b16 %v82
    %v440 = vunpack.c.l.b16 %v83
    %v441 = vunpack.c.h.b16 %v83
    %v442 = vunpack.c.l.b16 %v84
    %v443 = vunpack.c.h.b16 %v84
    %v444 = vunpack.c.l.b16 %v85
    %v445 = vunpack.c.h.b16 %v85
    %v446 = vunpack.c.l.b16 %v86
    %v447 = vunpack.c.h.b16 %v86
    %v448 = vpack.c.b16 %v418, %v416
    %v449 = vpack.c.b16 %v419, %v417
    %v450 = vpack.c.b16 %v422, %v420
    %v451 = vpack.c.b16 %v423, %v421
    %v452 = vpack.c.b16 %v426, %v424
    %v453 = vpack.c.b16 %v427, %v425
    %v454 = vpack.c.b16 %v430, %v428
    %v455 = vpack.c.b16 %v431, %v429
    %v456 = vpack.c.b16 %v434, %v432
    %v457 = vpack.c.b16 %v435, %v433
    %v458 = vpack.c.b16 %v438, %v436
    %v459 = vpack.c.b16 %v439, %v437
    %v460 = vpack.c.b16 %v442, %v440
    %v461 = vpack.c.b16 %v443, %v441
    %v462 = vpack.c.b16 %v446, %v444
    %v463 = vpack.c.b16 %v447, %v445
    %480 = vmatprep.subr.bf16.mxu0 %v463
    %481 = vmatpush1.bf16.msra.mxu0 %v462
    %482 = vmatprep.subr.bf16.mxu0 %v461
    %483 = vmatpush1.bf16.msra.mxu0 %v460
    %484 = vmatprep.subr.bf16.mxu0 %v459
    %485 = vmatpush1.bf16.msra.mxu0 %v458
    %486 = vmatprep.subr.bf16.mxu0 %v457
    %487 = vmatpush1.bf16.msra.mxu0 %v456
    %488 = vmatprep.subr.bf16.mxu0 %v455
    %489 = vmatpush1.bf16.msra.mxu0 %v454
    %490 = vmatprep.subr.bf16.mxu0 %v453
    %491 = vmatpush1.bf16.msra.mxu0 %v452
    %492 = vmatprep.subr.bf16.mxu0 %v451
    %493 = vmatpush1.bf16.msra.mxu0 %v450
    %494 = vmatprep.subr.bf16.mxu0 %v449
    %495 = vmatpush1.bf16.msra.mxu0 %v448
    %496 = vmatprep.subr.bf16.mxu0 0
    %497 = vmatpush2.bf16.msra.mxu0 0
    %498 = vmatprep.subr.bf16.mxu0 0
    %499 = vmatpush2.bf16.msra.mxu0 0
    %500 = vmatprep.subr.bf16.mxu0 0
    %501 = vmatpush2.bf16.msra.mxu0 0
    %502 = vmatprep.subr.bf16.mxu0 0
    %503 = vmatpush2.bf16.msra.mxu0 0
    %504 = vmatprep.subr.bf16.mxu0 0
    %505 = vmatpush2.bf16.msra.mxu0 0
    %506 = vmatprep.subr.bf16.mxu0 0
    %507 = vmatpush2.bf16.msra.mxu0 0
    %508 = vmatprep.subr.bf16.mxu0 0
    %509 = vmatpush2.bf16.msra.mxu0 0
    %510 = vmatprep.subr.bf16.mxu0 0
    %511 = vmatpush2.bf16.msra.mxu0 0
    %512 = vmatprep.mubr.bf16.mxu0 0
    %513 = vmatmul.mubr.bf16.gmra.mxu0 %v392
    %v514 = vpop.f32.mrf.mxu0
    %v515 = vadd.f32 %v338, %v514
    %v516 = vpop.f32.mrf.mxu0
    %v517 = vadd.f32 %v340, %v516
    %v518 = vpop.f32.mrf.mxu0
    %v519 = vadd.f32 %v342, %v518
    %v520 = vpop.f32.mrf.mxu0
    %v521 = vadd.f32 %v344, %v520
    %522 = vmatprep.mubr.bf16.mxu0 0
    %523 = vmatmul.mubr.bf16.gmra.mxu0 %v393
    %v524 = vpop.f32.mrf.mxu0
    %v525 = vadd.f32 %v348, %v524
    %v526 = vpop.f32.mrf.mxu0
    %v527 = vadd.f32 %v350, %v526
    %v528 = vpop.f32.mrf.mxu0
    %v529 = vadd.f32 %v352, %v528
    %v530 = vpop.f32.mrf.mxu0
    %v531 = vadd.f32 %v354, %v530
    %532 = vmatprep.mubr.bf16.mxu0 0
    %533 = vmatmul.mubr.bf16.gmra.mxu0 %v394
    %v534 = vpop.f32.mrf.mxu0
    %v535 = vadd.f32 %v358, %v534
    %v536 = vpop.f32.mrf.mxu0
    %v537 = vadd.f32 %v360, %v536
    %v538 = vpop.f32.mrf.mxu0
    %v539 = vadd.f32 %v362, %v538
    %v540 = vpop.f32.mrf.mxu0
    %v541 = vadd.f32 %v364, %v540
    %542 = vmatprep.mubr.bf16.mxu0 0
    %543 = vmatmul.mubr.bf16.gmra.mxu0 %v395
    %v544 = vpop.f32.mrf.mxu0
    %v545 = vadd.f32 %v368, %v544
    %v546 = vpop.f32.mrf.mxu0
    %v547 = vadd.f32 %v370, %v546
    %v548 = vpop.f32.mrf.mxu0
    %v549 = vadd.f32 %v372, %v548
    %v550 = vpop.f32.mrf.mxu0
    %v551 = vadd.f32 %v374, %v550
    %552 = vdwg.mxu0
    %v553 = vld [vmem:[%s0] sm:$0xe]
    %v554 = vld [vmem:[%s0 + $0xc] sm:$0xe]
    %v555 = vld [vmem:[%s0 + $0x18] sm:$0xe]
    %v556 = vld [vmem:[%s0 + $0x24] sm:$0xe]
    %vm565 = vcmask 1042432
    %vm566 = vcmask 1046532
    %vm567 = vmor %vm565, %vm566
    %v568 = vrot.slane %v553, 5
    %v569 = vrot.slane %v568, 4
    %v570 = vrot.slane %v64, 5
    %v571 = vsel %vm567, %v569, %v570
    %v572 = vrot.slane %v570, 4
    %v573 = vrot.slane %v87, 5
    %v574 = vsel %vm567, %v572, %v573
    %v575 = vrot.slane %v554, 5
    %v576 = vrot.slane %v575, 4
    %v577 = vrot.slane %v66, 5
    %v578 = vsel %vm567, %v576, %v577
    %v579 = vrot.slane %v577, 4
    %v580 = vrot.slane %v88, 5
    %v581 = vsel %vm567, %v579, %v580
    %v582 = vrot.slane %v555, 5
    %v583 = vrot.slane %v582, 4
    %v584 = vrot.slane %v68, 5
    %v585 = vsel %vm567, %v583, %v584
    %v586 = vrot.slane %v584, 4
    %v587 = vrot.slane %v89, 5
    %v588 = vsel %vm567, %v586, %v587
    %v589 = vrot.slane %v556, 5
    %v590 = vrot.slane %v589, 4
    %v591 = vrot.slane %v70, 5
    %v592 = vsel %vm567, %v590, %v591
    %v593 = vrot.slane %v591, 4
    %v594 = vrot.slane %v90, 5
    %v595 = vsel %vm567, %v593, %v594
    %s596 = scalar_lea.vmem [#allocation3], 256
    %v597 = vld [vmem:[%s596] sm:$0xff]
    %v598 = vld [vmem:[%s596 + $0x8] sm:$0xff]
    %v599 = vld [vmem:[%s596 + $0x10] sm:$0xff]
    %v600 = vld [vmem:[%s596 + $0x18] sm:$0xff]
    %v601 = vld [vmem:[%s596 + $0x20] sm:$0xff]
    %v602 = vld [vmem:[%s596 + $0x28] sm:$0xff]
    %v603 = vld [vmem:[%s596 + $0x30] sm:$0xff]
    %v604 = vld [vmem:[%s596 + $0x38] sm:$0xff]
    %v605 = vld [vmem:[%s596 + $0x40] sm:$0xff]
    %v606 = vld [vmem:[%s596 + $0x48] sm:$0xff]
    %v607 = vld [vmem:[%s596 + $0x50] sm:$0xff]
    %v608 = vld [vmem:[%s596 + $0x58] sm:$0xff]
    %v609 = vld [vmem:[%s596 + $0x60] sm:$0xff]
    %v610 = vld [vmem:[%s596 + $0x68] sm:$0xff]
    %v611 = vld [vmem:[%s596 + $0x70] sm:$0xff]
    %v612 = vld [vmem:[%s596 + $0x78] sm:$0xff]
    %v613 = vunpack.c.l.b16 %v571
    %v614 = vunpack.c.l.b16 %v574
    %v615 = vunpack.c.l.b16 %v578
    %v616 = vunpack.c.l.b16 %v581
    %v617 = vunpack.c.l.b16 %v585
    %v618 = vunpack.c.l.b16 %v588
    %v619 = vunpack.c.l.b16 %v592
    %v620 = vunpack.c.l.b16 %v595
    %v621 = vpack.c.b16 %v614, %v613
    %v622 = vpack.c.b16 %v616, %v615
    %v623 = vpack.c.b16 %v618, %v617
    %v624 = vpack.c.b16 %v620, %v619
    %v645 = vunpack.c.l.b16 %v597
    %v646 = vunpack.c.h.b16 %v597
    %v647 = vunpack.c.l.b16 %v598
    %v648 = vunpack.c.h.b16 %v598
    %v649 = vunpack.c.l.b16 %v599
    %v650 = vunpack.c.h.b16 %v599
    %v651 = vunpack.c.l.b16 %v600
    %v652 = vunpack.c.h.b16 %v600
    %v653 = vunpack.c.l.b16 %v601
    %v654 = vunpack.c.h.b16 %v601
    %v655 = vunpack.c.l.b16 %v602
    %v656 = vunpack.c.h.b16 %v602
    %v657 = vunpack.c.l.b16 %v603
    %v658 = vunpack.c.h.b16 %v603
    %v659 = vunpack.c.l.b16 %v604
    %v660 = vunpack.c.h.b16 %v604
    %v661 = vunpack.c.l.b16 %v605
    %v662 = vunpack.c.h.b16 %v605
    %v663 = vunpack.c.l.b16 %v606
    %v664 = vunpack.c.h.b16 %v606
    %v665 = vunpack.c.l.b16 %v607
    %v666 = vunpack.c.h.b16 %v607
    %v667 = vunpack.c.l.b16 %v608
    %v668 = vunpack.c.h.b16 %v608
    %v669 = vunpack.c.l.b16 %v609
    %v670 = vunpack.c.h.b16 %v609
    %v671 = vunpack.c.l.b16 %v610
    %v672 = vunpack.c.h.b16 %v610
    %v673 = vunpack.c.l.b16 %v611
    %v674 = vunpack.c.h.b16 %v611
    %v675 = vunpack.c.l.b16 %v612
    %v676 = vunpack.c.h.b16 %v612
    %v677 = vpack.c.b16 %v647, %v645
    %v678 = vpack.c.b16 %v648, %v646
    %v679 = vpack.c.b16 %v651, %v649
    %v680 = vpack.c.b16 %v652, %v650
    %v681 = vpack.c.b16 %v655, %v653
    %v682 = vpack.c.b16 %v656, %v654
    %v683 = vpack.c.b16 %v659, %v657
    %v684 = vpack.c.b16 %v660, %v658
    %v685 = vpack.c.b16 %v663, %v661
    %v686 = vpack.c.b16 %v664, %v662
    %v687 = vpack.c.b16 %v667, %v665
    %v688 = vpack.c.b16 %v668, %v666
    %v689 = vpack.c.b16 %v671, %v669
    %v690 = vpack.c.b16 %v672, %v670
    %v691 = vpack.c.b16 %v675, %v673
    %v692 = vpack.c.b16 %v676, %v674
    %709 = vmatprep.subr.bf16.mxu0 %v692
    %710 = vmatpush1.bf16.msra.mxu0 %v691
    %711 = vmatprep.subr.bf16.mxu0 %v690
    %712 = vmatpush1.bf16.msra.mxu0 %v689
    %713 = vmatprep.subr.bf16.mxu0 %v688
    %714 = vmatpush1.bf16.msra.mxu0 %v687
    %715 = vmatprep.subr.bf16.mxu0 %v686
    %716 = vmatpush1.bf16.msra.mxu0 %v685
    %717 = vmatprep.subr.bf16.mxu0 %v684
    %718 = vmatpush1.bf16.msra.mxu0 %v683
    %719 = vmatprep.subr.bf16.mxu0 %v682
    %720 = vmatpush1.bf16.msra.mxu0 %v681
    %721 = vmatprep.subr.bf16.mxu0 %v680
    %722 = vmatpush1.bf16.msra.mxu0 %v679
    %723 = vmatprep.subr.bf16.mxu0 %v678
    %724 = vmatpush1.bf16.msra.mxu0 %v677
    %725 = vmatprep.subr.bf16.mxu0 0
    %726 = vmatpush2.bf16.msra.mxu0 0
    %727 = vmatprep.subr.bf16.mxu0 0
    %728 = vmatpush2.bf16.msra.mxu0 0
    %729 = vmatprep.subr.bf16.mxu0 0
    %730 = vmatpush2.bf16.msra.mxu0 0
    %731 = vmatprep.subr.bf16.mxu0 0
    %732 = vmatpush2.bf16.msra.mxu0 0
    %733 = vmatprep.subr.bf16.mxu0 0
    %734 = vmatpush2.bf16.msra.mxu0 0
    %735 = vmatprep.subr.bf16.mxu0 0
    %736 = vmatpush2.bf16.msra.mxu0 0
    %737 = vmatprep.subr.bf16.mxu0 0
    %738 = vmatpush2.bf16.msra.mxu0 0
    %739 = vmatprep.subr.bf16.mxu0 0
    %740 = vmatpush2.bf16.msra.mxu0 0
    %741 = vmatprep.mubr.bf16.mxu0 0
    %742 = vmatmul.mubr.bf16.gmra.mxu0 %v621
    %v743 = vpop.f32.mrf.mxu0
    %v744 = vadd.f32 0.0, %v743
    %v745 = vpop.f32.mrf.mxu0
    %v746 = vadd.f32 0.0, %v745
    %v747 = vpop.f32.mrf.mxu0
    %v748 = vadd.f32 0.0, %v747
    %v749 = vpop.f32.mrf.mxu0
    %v750 = vadd.f32 0.0, %v749
    %751 = vmatprep.mubr.bf16.mxu0 0
    %752 = vmatmul.mubr.bf16.gmra.mxu0 %v622
    %v753 = vpop.f32.mrf.mxu0
    %v754 = vadd.f32 0.0, %v753
    %v755 = vpop.f32.mrf.mxu0
    %v756 = vadd.f32 0.0, %v755
    %v757 = vpop.f32.mrf.mxu0
    %v758 = vadd.f32 0.0, %v757
    %v759 = vpop.f32.mrf.mxu0
    %v760 = vadd.f32 0.0, %v759
    %761 = vmatprep.mubr.bf16.mxu0 0
    %762 = vmatmul.mubr.bf16.gmra.mxu0 %v623
    %v763 = vpop.f32.mrf.mxu0
    %v764 = vadd.f32 0.0, %v763
    %v765 = vpop.f32.mrf.mxu0
    %v766 = vadd.f32 0.0, %v765
    %v767 = vpop.f32.mrf.mxu0
    %v768 = vadd.f32 0.0, %v767
    %v769 = vpop.f32.mrf.mxu0
    %v770 = vadd.f32 0.0, %v769
    %771 = vmatprep.mubr.bf16.mxu0 0
    %772 = vmatmul.mubr.bf16.gmra.mxu0 %v624
    %v773 = vpop.f32.mrf.mxu0
    %v774 = vadd.f32 0.0, %v773
    %v775 = vpop.f32.mrf.mxu0
    %v776 = vadd.f32 0.0, %v775
    %v777 = vpop.f32.mrf.mxu0
    %v778 = vadd.f32 0.0, %v777
    %v779 = vpop.f32.mrf.mxu0
    %v780 = vadd.f32 0.0, %v779
    %781 = vdwg.mxu0
    %v782 = vadd.f32 %v515, %v744
    %v783 = vadd.f32 %v517, %v746
    %v784 = vadd.f32 %v519, %v748
    %v785 = vadd.f32 %v521, %v750
    %v786 = vadd.f32 %v525, %v754
    %v787 = vadd.f32 %v527, %v756
    %v788 = vadd.f32 %v529, %v758
    %v789 = vadd.f32 %v531, %v760
    %v790 = vadd.f32 %v535, %v764
    %v791 = vadd.f32 %v537, %v766
    %v792 = vadd.f32 %v539, %v768
    %v793 = vadd.f32 %v541, %v770
    %v794 = vadd.f32 %v545, %v774
    %v795 = vadd.f32 %v547, %v776
    %v796 = vadd.f32 %v549, %v778
    %v797 = vadd.f32 %v551, %v780
    %v798 = vld [vmem:[%s0 + $0x8] sm:$0x3]
    %v799 = vld [vmem:[%s0 + $0x14] sm:$0x3]
    %v800 = vld [vmem:[%s0 + $0x20] sm:$0x3]
    %v801 = vld [vmem:[%s0 + $0x2c] sm:$0x3]
    %vm802 = vsmask.f32 2304
    %vm803 = vsmask.f32 6416
    %vm804 = vmor %vm802, %vm803
    %v806 = vshrl.u32 %v553, 16
    %v808 = vrot.slane %v806, 5
    %v809 = vshll.u32 %v553, 16
    %v811 = vrot.slane %v809, 6
    %v812 = vor.u32 %v808, %v811
    %v813 = vrot.slane %v812, 4
    %v814 = vrot.slane %v108, 5
    %v815 = vrot.slane %v104, 6
    %v816 = vor.u32 %v814, %v815
    %v817 = vsel %vm804, %v813, %v816
    %v818 = vrot.slane %v816, 4
    %v820 = vshrl.u32 %v798, 16
    %v822 = vrot.slane %v820, 5
    %v823 = vshll.u32 %v798, 16
    %v825 = vrot.slane %v823, 6
    %v826 = vor.u32 %v822, %v825
    %v827 = vsel %vm804, %v818, %v826
    %v829 = vshrl.u32 %v554, 16
    %v831 = vrot.slane %v829, 5
    %v832 = vshll.u32 %v554, 16
    %v834 = vrot.slane %v832, 6
    %v835 = vor.u32 %v831, %v834
    %v836 = vrot.slane %v835, 4
    %v837 = vrot.slane %v132, 5
    %v838 = vrot.slane %v128, 6
    %v839 = vor.u32 %v837, %v838
    %v840 = vsel %vm804, %v836, %v839
    %v841 = vrot.slane %v839, 4
    %v843 = vshrl.u32 %v799, 16
    %v845 = vrot.slane %v843, 5
    %v846 = vshll.u32 %v799, 16
    %v848 = vrot.slane %v846, 6
    %v849 = vor.u32 %v845, %v848
    %v850 = vsel %vm804, %v841, %v849
    %v852 = vshrl.u32 %v555, 16
    %v854 = vrot.slane %v852, 5
    %v855 = vshll.u32 %v555, 16
    %v857 = vrot.slane %v855, 6
    %v858 = vor.u32 %v854, %v857
    %v859 = vrot.slane %v858, 4
    %v860 = vrot.slane %v156, 5
    %v861 = vrot.slane %v152, 6
    %v862 = vor.u32 %v860, %v861
    %v863 = vsel %vm804, %v859, %v862
    %v864 = vrot.slane %v862, 4
    %v866 = vshrl.u32 %v800, 16
    %v868 = vrot.slane %v866, 5
    %v869 = vshll.u32 %v800, 16
    %v871 = vrot.slane %v869, 6
    %v872 = vor.u32 %v868, %v871
    %v873 = vsel %vm804, %v864, %v872
    %v875 = vshrl.u32 %v556, 16
    %v877 = vrot.slane %v875, 5
    %v878 = vshll.u32 %v556, 16
    %v880 = vrot.slane %v878, 6
    %v881 = vor.u32 %v877, %v880
    %v882 = vrot.slane %v881, 4
    %v883 = vrot.slane %v180, 5
    %v884 = vrot.slane %v176, 6
    %v885 = vor.u32 %v883, %v884
    %v886 = vsel %vm804, %v882, %v885
    %v887 = vrot.slane %v885, 4
    %v889 = vshrl.u32 %v801, 16
    %v891 = vrot.slane %v889, 5
    %v892 = vshll.u32 %v801, 16
    %v894 = vrot.slane %v892, 6
    %v895 = vor.u32 %v891, %v894
    %v896 = vsel %vm804, %v887, %v895
    %s897 = scalar_lea.vmem [#allocation3], 384
    %v898 = vld [vmem:[%s897] sm:$0xff]
    %v899 = vld [vmem:[%s897 + $0x8] sm:$0xff]
    %v900 = vld [vmem:[%s897 + $0x10] sm:$0xff]
    %v901 = vld [vmem:[%s897 + $0x18] sm:$0xff]
    %v902 = vld [vmem:[%s897 + $0x20] sm:$0xff]
    %v903 = vld [vmem:[%s897 + $0x28] sm:$0xff]
    %v904 = vld [vmem:[%s897 + $0x30] sm:$0xff]
    %v905 = vld [vmem:[%s897 + $0x38] sm:$0xff]
    %v906 = vld [vmem:[%s897 + $0x40] sm:$0xff]
    %v907 = vld [vmem:[%s897 + $0x48] sm:$0xff]
    %v908 = vld [vmem:[%s897 + $0x50] sm:$0xff]
    %v909 = vld [vmem:[%s897 + $0x58] sm:$0xff]
    %v910 = vld [vmem:[%s897 + $0x60] sm:$0xff]
    %v911 = vld [vmem:[%s897 + $0x68] sm:$0xff]
    %v912 = vld [vmem:[%s897 + $0x70] sm:$0xff]
    %v913 = vld [vmem:[%s897 + $0x78] sm:$0xff]
    %v914 = vunpack.c.l.b16 %v817
    %v915 = vunpack.c.l.b16 %v827
    %v916 = vunpack.c.l.b16 %v840
    %v917 = vunpack.c.l.b16 %v850
    %v918 = vunpack.c.l.b16 %v863
    %v919 = vunpack.c.l.b16 %v873
    %v920 = vunpack.c.l.b16 %v886
    %v921 = vunpack.c.l.b16 %v896
    %v922 = vpack.c.b16 %v915, %v914
    %v923 = vpack.c.b16 %v917, %v916
    %v924 = vpack.c.b16 %v919, %v918
    %v925 = vpack.c.b16 %v921, %v920
    %v946 = vunpack.c.l.b16 %v898
    %v947 = vunpack.c.h.b16 %v898
    %v948 = vunpack.c.l.b16 %v899
    %v949 = vunpack.c.h.b16 %v899
    %v950 = vunpack.c.l.b16 %v900
    %v951 = vunpack.c.h.b16 %v900
    %v952 = vunpack.c.l.b16 %v901
    %v953 = vunpack.c.h.b16 %v901
    %v954 = vunpack.c.l.b16 %v902
    %v955 = vunpack.c.h.b16 %v902
    %v956 = vunpack.c.l.b16 %v903
    %v957 = vunpack.c.h.b16 %v903
    %v958 = vunpack.c.l.b16 %v904
    %v959 = vunpack.c.h.b16 %v904
    %v960 = vunpack.c.l.b16 %v905
    %v961 = vunpack.c.h.b16 %v905
    %v962 = vunpack.c.l.b16 %v906
    %v963 = vunpack.c.h.b16 %v906
    %v964 = vunpack.c.l.b16 %v907
    %v965 = vunpack.c.h.b16 %v907
    %v966 = vunpack.c.l.b16 %v908
    %v967 = vunpack.c.h.b16 %v908
    %v968 = vunpack.c.l.b16 %v909
    %v969 = vunpack.c.h.b16 %v909
    %v970 = vunpack.c.l.b16 %v910
    %v971 = vunpack.c.h.b16 %v910
    %v972 = vunpack.c.l.b16 %v911
    %v973 = vunpack.c.h.b16 %v911
    %v974 = vunpack.c.l.b16 %v912
    %v975 = vunpack.c.h.b16 %v912
    %v976 = vunpack.c.l.b16 %v913
    %v977 = vunpack.c.h.b16 %v913
    %v978 = vpack.c.b16 %v948, %v946
    %v979 = vpack.c.b16 %v949, %v947
    %v980 = vpack.c.b16 %v952, %v950
    %v981 = vpack.c.b16 %v953, %v951
    %v982 = vpack.c.b16 %v956, %v954
    %v983 = vpack.c.b16 %v957, %v955
    %v984 = vpack.c.b16 %v960, %v958
    %v985 = vpack.c.b16 %v961, %v959
    %v986 = vpack.c.b16 %v964, %v962
    %v987 = vpack.c.b16 %v965, %v963
    %v988 = vpack.c.b16 %v968, %v966
    %v989 = vpack.c.b16 %v969, %v967
    %v990 = vpack.c.b16 %v972, %v970
    %v991 = vpack.c.b16 %v973, %v971
    %v992 = vpack.c.b16 %v976, %v974
    %v993 = vpack.c.b16 %v977, %v975
    %1010 = vmatprep.subr.bf16.mxu0 %v993
    %1011 = vmatpush1.bf16.msra.mxu0 %v992
    %1012 = vmatprep.subr.bf16.mxu0 %v991
    %1013 = vmatpush1.bf16.msra.mxu0 %v990
    %1014 = vmatprep.subr.bf16.mxu0 %v989
    %1015 = vmatpush1.bf16.msra.mxu0 %v988
    %1016 = vmatprep.subr.bf16.mxu0 %v987
    %1017 = vmatpush1.bf16.msra.mxu0 %v986
    %1018 = vmatprep.subr.bf16.mxu0 %v985
    %1019 = vmatpush1.bf16.msra.mxu0 %v984
    %1020 = vmatprep.subr.bf16.mxu0 %v983
    %1021 = vmatpush1.bf16.msra.mxu0 %v982
    %1022 = vmatprep.subr.bf16.mxu0 %v981
    %1023 = vmatpush1.bf16.msra.mxu0 %v980
    %1024 = vmatprep.subr.bf16.mxu0 %v979
    %1025 = vmatpush1.bf16.msra.mxu0 %v978
    %1026 = vmatprep.subr.bf16.mxu0 0
    %1027 = vmatpush2.bf16.msra.mxu0 0
    %1028 = vmatprep.subr.bf16.mxu0 0
    %1029 = vmatpush2.bf16.msra.mxu0 0
    %1030 = vmatprep.subr.bf16.mxu0 0
    %1031 = vmatpush2.bf16.msra.mxu0 0
    %1032 = vmatprep.subr.bf16.mxu0 0
    %1033 = vmatpush2.bf16.msra.mxu0 0
    %1034 = vmatprep.subr.bf16.mxu0 0
    %1035 = vmatpush2.bf16.msra.mxu0 0
    %1036 = vmatprep.subr.bf16.mxu0 0
    %1037 = vmatpush2.bf16.msra.mxu0 0
    %1038 = vmatprep.subr.bf16.mxu0 0
    %1039 = vmatpush2.bf16.msra.mxu0 0
    %1040 = vmatprep.subr.bf16.mxu0 0
    %1041 = vmatpush2.bf16.msra.mxu0 0
    %1042 = vmatprep.mubr.bf16.mxu0 0
    %1043 = vmatmul.mubr.bf16.gmra.mxu0 %v922
    %v1044 = vpop.f32.mrf.mxu0
    %v1045 = vadd.f32 0.0, %v1044
    %v1046 = vpop.f32.mrf.mxu0
    %v1047 = vadd.f32 0.0, %v1046
    %v1048 = vpop.f32.mrf.mxu0
    %v1049 = vadd.f32 0.0, %v1048
    %v1050 = vpop.f32.mrf.mxu0
    %v1051 = vadd.f32 0.0, %v1050
    %1052 = vmatprep.mubr.bf16.mxu0 0
    %1053 = vmatmul.mubr.bf16.gmra.mxu0 %v923
    %v1054 = vpop.f32.mrf.mxu0
    %v1055 = vadd.f32 0.0, %v1054
    %v1056 = vpop.f32.mrf.mxu0
    %v1057 = vadd.f32 0.0, %v1056
    %v1058 = vpop.f32.mrf.mxu0
    %v1059 = vadd.f32 0.0, %v1058
    %v1060 = vpop.f32.mrf.mxu0
    %v1061 = vadd.f32 0.0, %v1060
    %1062 = vmatprep.mubr.bf16.mxu0 0
    %1063 = vmatmul.mubr.bf16.gmra.mxu0 %v924
    %v1064 = vpop.f32.mrf.mxu0
    %v1065 = vadd.f32 0.0, %v1064
    %v1066 = vpop.f32.mrf.mxu0
    %v1067 = vadd.f32 0.0, %v1066
    %v1068 = vpop.f32.mrf.mxu0
    %v1069 = vadd.f32 0.0, %v1068
    %v1070 = vpop.f32.mrf.mxu0
    %v1071 = vadd.f32 0.0, %v1070
    %1072 = vmatprep.mubr.bf16.mxu0 0
    %1073 = vmatmul.mubr.bf16.gmra.mxu0 %v925
    %v1074 = vpop.f32.mrf.mxu0
    %v1075 = vadd.f32 0.0, %v1074
    %v1076 = vpop.f32.mrf.mxu0
    %v1077 = vadd.f32 0.0, %v1076
    %v1078 = vpop.f32.mrf.mxu0
    %v1079 = vadd.f32 0.0, %v1078
    %v1080 = vpop.f32.mrf.mxu0
    %v1081 = vadd.f32 0.0, %v1080
    %1082 = vdwg.mxu0
    %v1083 = vadd.f32 %v782, %v1045
    %v1084 = vadd.f32 %v783, %v1047
    %v1085 = vadd.f32 %v784, %v1049
    %v1086 = vadd.f32 %v785, %v1051
    %v1087 = vadd.f32 %v786, %v1055
    %v1088 = vadd.f32 %v787, %v1057
    %v1089 = vadd.f32 %v788, %v1059
    %v1090 = vadd.f32 %v789, %v1061
    %v1091 = vadd.f32 %v790, %v1065
    %v1092 = vadd.f32 %v791, %v1067
    %v1093 = vadd.f32 %v792, %v1069
    %v1094 = vadd.f32 %v793, %v1071
    %v1095 = vadd.f32 %v794, %v1075
    %v1096 = vadd.f32 %v795, %v1077
    %v1097 = vadd.f32 %v796, %v1079
    %v1098 = vadd.f32 %v797, %v1081
    %v1099 = vld [vmem:[%s0] sm:$0xc]
    %v1100 = vld [vmem:[%s0 + $0xc] sm:$0xc]
    %v1101 = vld [vmem:[%s0 + $0x18] sm:$0xc]
    %v1102 = vld [vmem:[%s0 + $0x24] sm:$0xc]
    %vm1111 = vcmask 1041408
    %vm1112 = vcmask 1045508
    %vm1113 = vmor %vm1111, %vm1112
    %v1114 = vrot.slane %v1099, 6
    %v1115 = vrot.slane %v1114, 4
    %v1116 = vrot.slane %v64, 6
    %v1117 = vsel %vm1113, %v1115, %v1116
    %v1118 = vrot.slane %v1116, 4
    %v1119 = vrot.slane %v798, 6
    %v1120 = vsel %vm1113, %v1118, %v1119
    %v1121 = vrot.slane %v1100, 6
    %v1122 = vrot.slane %v1121, 4
    %v1123 = vrot.slane %v66, 6
    %v1124 = vsel %vm1113, %v1122, %v1123
    %v1125 = vrot.slane %v1123, 4
    %v1126 = vrot.slane %v799, 6
    %v1127 = vsel %vm1113, %v1125, %v1126
    %v1128 = vrot.slane %v1101, 6
    %v1129 = vrot.slane %v1128, 4
    %v1130 = vrot.slane %v68, 6
    %v1131 = vsel %vm1113, %v1129, %v1130
    %v1132 = vrot.slane %v1130, 4
    %v1133 = vrot.slane %v800, 6
    %v1134 = vsel %vm1113, %v1132, %v1133
    %v1135 = vrot.slane %v1102, 6
    %v1136 = vrot.slane %v1135, 4
    %v1137 = vrot.slane %v70, 6
    %v1138 = vsel %vm1113, %v1136, %v1137
    %v1139 = vrot.slane %v1137, 4
    %v1140 = vrot.slane %v801, 6
    %v1141 = vsel %vm1113, %v1139, %v1140
    %s1142 = scalar_lea.vmem [#allocation3], 512
    %v1143 = vld [vmem:[%s1142] sm:$0xff]
    %v1144 = vld [vmem:[%s1142 + $0x8] sm:$0xff]
    %v1145 = vld [vmem:[%s1142 + $0x10] sm:$0xff]
    %v1146 = vld [vmem:[%s1142 + $0x18] sm:$0xff]
    %v1147 = vld [vmem:[%s1142 + $0x20] sm:$0xff]
    %v1148 = vld [vmem:[%s1142 + $0x28] sm:$0xff]
    %v1149 = vld [vmem:[%s1142 + $0x30] sm:$0xff]
    %v1150 = vld [vmem:[%s1142 + $0x38] sm:$0xff]
    %v1151 = vld [vmem:[%s1142 + $0x40] sm:$0xff]
    %v1152 = vld [vmem:[%s1142 + $0x48] sm:$0xff]
    %v1153 = vld [vmem:[%s1142 + $0x50] sm:$0xff]
    %v1154 = vld [vmem:[%s1142 + $0x58] sm:$0xff]
    %v1155 = vld [vmem:[%s1142 + $0x60] sm:$0xff]
    %v1156 = vld [vmem:[%s1142 + $0x68] sm:$0xff]
    %v1157 = vld [vmem:[%s1142 + $0x70] sm:$0xff]
    %v1158 = vld [vmem:[%s1142 + $0x78] sm:$0xff]
    %v1159 = vunpack.c.l.b16 %v1117
    %v1160 = vunpack.c.l.b16 %v1120
    %v1161 = vunpack.c.l.b16 %v1124
    %v1162 = vunpack.c.l.b16 %v1127
    %v1163 = vunpack.c.l.b16 %v1131
    %v1164 = vunpack.c.l.b16 %v1134
    %v1165 = vunpack.c.l.b16 %v1138
    %v1166 = vunpack.c.l.b16 %v1141
    %v1167 = vpack.c.b16 %v1160, %v1159
    %v1168 = vpack.c.b16 %v1162, %v1161
    %v1169 = vpack.c.b16 %v1164, %v1163
    %v1170 = vpack.c.b16 %v1166, %v1165
    %v1191 = vunpack.c.l.b16 %v1143
    %v1192 = vunpack.c.h.b16 %v1143
    %v1193 = vunpack.c.l.b16 %v1144
    %v1194 = vunpack.c.h.b16 %v1144
    %v1195 = vunpack.c.l.b16 %v1145
    %v1196 = vunpack.c.h.b16 %v1145
    %v1197 = vunpack.c.l.b16 %v1146
    %v1198 = vunpack.c.h.b16 %v1146
    %v1199 = vunpack.c.l.b16 %v1147
    %v1200 = vunpack.c.h.b16 %v1147
    %v1201 = vunpack.c.l.b16 %v1148
    %v1202 = vunpack.c.h.b16 %v1148
    %v1203 = vunpack.c.l.b16 %v1149
    %v1204 = vunpack.c.h.b16 %v1149
    %v1205 = vunpack.c.l.b16 %v1150
    %v1206 = vunpack.c.h.b16 %v1150
    %v1207 = vunpack.c.l.b16 %v1151
    %v1208 = vunpack.c.h.b16 %v1151
    %v1209 = vunpack.c.l.b16 %v1152
    %v1210 = vunpack.c.h.b16 %v1152
    %v1211 = vunpack.c.l.b16 %v1153
    %v1212 = vunpack.c.h.b16 %v1153
    %v1213 = vunpack.c.l.b16 %v1154
    %v1214 = vunpack.c.h.b16 %v1154
    %v1215 = vunpack.c.l.b16 %v1155
    %v1216 = vunpack.c.h.b16 %v1155
    %v1217 = vunpack.c.l.b16 %v1156
    %v1218 = vunpack.c.h.b16 %v1156
    %v1219 = vunpack.c.l.b16 %v1157
    %v1220 = vunpack.c.h.b16 %v1157
    %v1221 = vunpack.c.l.b16 %v1158
    %v1222 = vunpack.c.h.b16 %v1158
    %v1223 = vpack.c.b16 %v1193, %v1191
    %v1224 = vpack.c.b16 %v1194, %v1192
    %v1225 = vpack.c.b16 %v1197, %v1195
    %v1226 = vpack.c.b16 %v1198, %v1196
    %v1227 = vpack.c.b16 %v1201, %v1199
    %v1228 = vpack.c.b16 %v1202, %v1200
    %v1229 = vpack.c.b16 %v1205, %v1203
    %v1230 = vpack.c.b16 %v1206, %v1204
    %v1231 = vpack.c.b16 %v1209, %v1207
    %v1232 = vpack.c.b16 %v1210, %v1208
    %v1233 = vpack.c.b16 %v1213, %v1211
    %v1234 = vpack.c.b16 %v1214, %v1212
    %v1235 = vpack.c.b16 %v1217, %v1215
    %v1236 = vpack.c.b16 %v1218, %v1216
    %v1237 = vpack.c.b16 %v1221, %v1219
    %v1238 = vpack.c.b16 %v1222, %v1220
    %1255 = vmatprep.subr.bf16.mxu0 %v1238
    %1256 = vmatpush1.bf16.msra.mxu0 %v1237
    %1257 = vmatprep.subr.bf16.mxu0 %v1236
    %1258 = vmatpush1.bf16.msra.mxu0 %v1235
    %1259 = vmatprep.subr.bf16.mxu0 %v1234
    %1260 = vmatpush1.bf16.msra.mxu0 %v1233
    %1261 = vmatprep.subr.bf16.mxu0 %v1232
    %1262 = vmatpush1.bf16.msra.mxu0 %v1231
    %1263 = vmatprep.subr.bf16.mxu0 %v1230
    %1264 = vmatpush1.bf16.msra.mxu0 %v1229
    %1265 = vmatprep.subr.bf16.mxu0 %v1228
    %1266 = vmatpush1.bf16.msra.mxu0 %v1227
    %1267 = vmatprep.subr.bf16.mxu0 %v1226
    %1268 = vmatpush1.bf16.msra.mxu0 %v1225
    %1269 = vmatprep.subr.bf16.mxu0 %v1224
    %1270 = vmatpush1.bf16.msra.mxu0 %v1223
    %1271 = vmatprep.subr.bf16.mxu0 0
    %1272 = vmatpush2.bf16.msra.mxu0 0
    %1273 = vmatprep.subr.bf16.mxu0 0
    %1274 = vmatpush2.bf16.msra.mxu0 0
    %1275 = vmatprep.subr.bf16.mxu0 0
    %1276 = vmatpush2.bf16.msra.mxu0 0
    %1277 = vmatprep.subr.bf16.mxu0 0
    %1278 = vmatpush2.bf16.msra.mxu0 0
    %1279 = vmatprep.subr.bf16.mxu0 0
    %1280 = vmatpush2.bf16.msra.mxu0 0
    %1281 = vmatprep.subr.bf16.mxu0 0
    %1282 = vmatpush2.bf16.msra.mxu0 0
    %1283 = vmatprep.subr.bf16.mxu0 0
    %1284 = vmatpush2.bf16.msra.mxu0 0
    %1285 = vmatprep.subr.bf16.mxu0 0
    %1286 = vmatpush2.bf16.msra.mxu0 0
    %1287 = vmatprep.mubr.bf16.mxu0 0
    %1288 = vmatmul.mubr.bf16.gmra.mxu0 %v1167
    %v1289 = vpop.f32.mrf.mxu0
    %v1290 = vadd.f32 0.0, %v1289
    %v1291 = vpop.f32.mrf.mxu0
    %v1292 = vadd.f32 0.0, %v1291
    %v1293 = vpop.f32.mrf.mxu0
    %v1294 = vadd.f32 0.0, %v1293
    %v1295 = vpop.f32.mrf.mxu0
    %v1296 = vadd.f32 0.0, %v1295
    %1297 = vmatprep.mubr.bf16.mxu0 0
    %1298 = vmatmul.mubr.bf16.gmra.mxu0 %v1168
    %v1299 = vpop.f32.mrf.mxu0
    %v1300 = vadd.f32 0.0, %v1299
    %v1301 = vpop.f32.mrf.mxu0
    %v1302 = vadd.f32 0.0, %v1301
    %v1303 = vpop.f32.mrf.mxu0
    %v1304 = vadd.f32 0.0, %v1303
    %v1305 = vpop.f32.mrf.mxu0
    %v1306 = vadd.f32 0.0, %v1305
    %1307 = vmatprep.mubr.bf16.mxu0 0
    %1308 = vmatmul.mubr.bf16.gmra.mxu0 %v1169
    %v1309 = vpop.f32.mrf.mxu0
    %v1310 = vadd.f32 0.0, %v1309
    %v1311 = vpop.f32.mrf.mxu0
    %v1312 = vadd.f32 0.0, %v1311
    %v1313 = vpop.f32.mrf.mxu0
    %v1314 = vadd.f32 0.0, %v1313
    %v1315 = vpop.f32.mrf.mxu0
    %v1316 = vadd.f32 0.0, %v1315
    %1317 = vmatprep.mubr.bf16.mxu0 0
    %1318 = vmatmul.mubr.bf16.gmra.mxu0 %v1170
    %v1319 = vpop.f32.mrf.mxu0
    %v1320 = vadd.f32 0.0, %v1319
    %v1321 = vpop.f32.mrf.mxu0
    %v1322 = vadd.f32 0.0, %v1321
    %v1323 = vpop.f32.mrf.mxu0
    %v1324 = vadd.f32 0.0, %v1323
    %v1325 = vpop.f32.mrf.mxu0
    %v1326 = vadd.f32 0.0, %v1325
    %1327 = vdwg.mxu0
    %v1328 = vadd.f32 %v1083, %v1290
    %v1329 = vadd.f32 %v1084, %v1292
    %v1330 = vadd.f32 %v1085, %v1294
    %v1331 = vadd.f32 %v1086, %v1296
    %v1332 = vadd.f32 %v1087, %v1300
    %v1333 = vadd.f32 %v1088, %v1302
    %v1334 = vadd.f32 %v1089, %v1304
    %v1335 = vadd.f32 %v1090, %v1306
    %v1336 = vadd.f32 %v1091, %v1310
    %v1337 = vadd.f32 %v1092, %v1312
    %v1338 = vadd.f32 %v1093, %v1314
    %v1339 = vadd.f32 %v1094, %v1316
    %v1340 = vadd.f32 %v1095, %v1320
    %v1341 = vadd.f32 %v1096, %v1322
    %v1342 = vadd.f32 %v1097, %v1324
    %v1343 = vadd.f32 %v1098, %v1326
    %v1344 = vld [vmem:[%s2] sm:$0x3]
    %v1346 = vlaneseq
    %v1347 = vshrl.u32 %v1346, 7
    %v1348 = vsub.s32 0, %v1347
    %v1349 = vrot.slane %v1344, %v1348
    %v1350 = vlaneseq
    %v1351 = vshrl.u32 %v1350, 7
    %v1352 = vsub.s32 1, %v1351
    %v1353 = vrot.slane %v1344, %v1352
    %v1356 = vadd.f32 %v1328, %v1349
    %v1357 = vadd.f32 %v1329, %v1353
    %v1358 = vadd.f32 %v1330, %v1349
    %v1359 = vadd.f32 %v1331, %v1353
    %v1360 = vadd.f32 %v1332, %v1349
    %v1361 = vadd.f32 %v1333, %v1353
    %v1362 = vadd.f32 %v1334, %v1349
    %v1363 = vadd.f32 %v1335, %v1353
    %v1364 = vadd.f32 %v1336, %v1349
    %v1365 = vadd.f32 %v1337, %v1353
    %v1366 = vadd.f32 %v1338, %v1349
    %v1367 = vadd.f32 %v1339, %v1353
    %v1368 = vadd.f32 %v1340, %v1349
    %v1369 = vadd.f32 %v1341, %v1353
    %v1370 = vadd.f32 %v1342, %v1349
    %v1371 = vadd.f32 %v1343, %v1353
    %vm1372 = vcmp.gt.f32.partialorder %v1356, 0.0
    %vm1373 = vcmp.gt.f32.partialorder %v1357, 0.0
    %vm1374 = vcmp.gt.f32.partialorder %v1358, 0.0
    %vm1375 = vcmp.gt.f32.partialorder %v1359, 0.0
    %vm1376 = vcmp.gt.f32.partialorder %v1360, 0.0
    %vm1377 = vcmp.gt.f32.partialorder %v1361, 0.0
    %vm1378 = vcmp.gt.f32.partialorder %v1362, 0.0
    %vm1379 = vcmp.gt.f32.partialorder %v1363, 0.0
    %vm1380 = vcmp.gt.f32.partialorder %v1364, 0.0
    %vm1381 = vcmp.gt.f32.partialorder %v1365, 0.0
    %vm1382 = vcmp.gt.f32.partialorder %v1366, 0.0
    %vm1383 = vcmp.gt.f32.partialorder %v1367, 0.0
    %vm1384 = vcmp.gt.f32.partialorder %v1368, 0.0
    %vm1385 = vcmp.gt.f32.partialorder %v1369, 0.0
    %vm1386 = vcmp.gt.f32.partialorder %v1370, 0.0
    %vm1387 = vcmp.gt.f32.partialorder %v1371, 0.0
    %v1388 = vmul.f32 %v1356, 0.01
    %v1389 = vmul.f32 %v1357, 0.01
    %v1390 = vmul.f32 %v1358, 0.01
    %v1391 = vmul.f32 %v1359, 0.01
    %v1392 = vmul.f32 %v1360, 0.01
    %v1393 = vmul.f32 %v1361, 0.01
    %v1394 = vmul.f32 %v1362, 0.01
    %v1395 = vmul.f32 %v1363, 0.01
    %v1396 = vmul.f32 %v1364, 0.01
    %v1397 = vmul.f32 %v1365, 0.01
    %v1398 = vmul.f32 %v1366, 0.01
    %v1399 = vmul.f32 %v1367, 0.01
    %v1400 = vmul.f32 %v1368, 0.01
    %v1401 = vmul.f32 %v1369, 0.01
    %v1402 = vmul.f32 %v1370, 0.01
    %v1403 = vmul.f32 %v1371, 0.01
    %v1404 = vsel %vm1372, %v1356, %v1388
    %v1405 = vsel %vm1373, %v1357, %v1389
    %v1406 = vsel %vm1374, %v1358, %v1390
    %v1407 = vsel %vm1375, %v1359, %v1391
    %v1408 = vsel %vm1376, %v1360, %v1392
    %v1409 = vsel %vm1377, %v1361, %v1393
    %v1410 = vsel %vm1378, %v1362, %v1394
    %v1411 = vsel %vm1379, %v1363, %v1395
    %v1412 = vsel %vm1380, %v1364, %v1396
    %v1413 = vsel %vm1381, %v1365, %v1397
    %v1414 = vsel %vm1382, %v1366, %v1398
    %v1415 = vsel %vm1383, %v1367, %v1399
    %v1416 = vsel %vm1384, %v1368, %v1400
    %v1417 = vsel %vm1385, %v1369, %v1401
    %v1418 = vsel %vm1386, %v1370, %v1402
    %v1419 = vsel %vm1387, %v1371, %v1403
    %v1420 = vmax.f32 %v1404, %v1406
    %v1421 = vrot.slane %v1420, 4
    %v1422 = vmax.f32 %v1420, %v1421
    %v1423 = vrot.slane %v1422, 2
    %v1424 = vmax.f32 %v1422, %v1423
    %v1425 = vrot.slane %v1424, 1
    %v1426 = vmax.f32 %v1424, %v1425
    %v1427 = vmax.f32 %v1405, %v1407
    %v1428 = vrot.slane %v1427, 4
    %v1429 = vmax.f32 %v1427, %v1428
    %v1430 = vrot.slane %v1429, 2
    %v1431 = vmax.f32 %v1429, %v1430
    %v1432 = vrot.slane %v1431, 1
    %v1433 = vmax.f32 %v1431, %v1432
    %v1434 = vmax.f32 %v1408, %v1410
    %v1435 = vrot.slane %v1434, 4
    %v1436 = vmax.f32 %v1434, %v1435
    %v1437 = vrot.slane %v1436, 2
    %v1438 = vmax.f32 %v1436, %v1437
    %v1439 = vrot.slane %v1438, 1
    %v1440 = vmax.f32 %v1438, %v1439
    %v1441 = vmax.f32 %v1409, %v1411
    %v1442 = vrot.slane %v1441, 4
    %v1443 = vmax.f32 %v1441, %v1442
    %v1444 = vrot.slane %v1443, 2
    %v1445 = vmax.f32 %v1443, %v1444
    %v1446 = vrot.slane %v1445, 1
    %v1447 = vmax.f32 %v1445, %v1446
    %v1448 = vmax.f32 %v1412, %v1414
    %v1449 = vrot.slane %v1448, 4
    %v1450 = vmax.f32 %v1448, %v1449
    %v1451 = vrot.slane %v1450, 2
    %v1452 = vmax.f32 %v1450, %v1451
    %v1453 = vrot.slane %v1452, 1
    %v1454 = vmax.f32 %v1452, %v1453
    %v1455 = vmax.f32 %v1413, %v1415
    %v1456 = vrot.slane %v1455, 4
    %v1457 = vmax.f32 %v1455, %v1456
    %v1458 = vrot.slane %v1457, 2
    %v1459 = vmax.f32 %v1457, %v1458
    %v1460 = vrot.slane %v1459, 1
    %v1461 = vmax.f32 %v1459, %v1460
    %v1462 = vmax.f32 %v1416, %v1418
    %v1463 = vrot.slane %v1462, 4
    %v1464 = vmax.f32 %v1462, %v1463
    %v1465 = vrot.slane %v1464, 2
    %v1466 = vmax.f32 %v1464, %v1465
    %v1467 = vrot.slane %v1466, 1
    %v1468 = vmax.f32 %v1466, %v1467
    %v1469 = vmax.f32 %v1417, %v1419
    %v1470 = vrot.slane %v1469, 4
    %v1471 = vmax.f32 %v1469, %v1470
    %v1472 = vrot.slane %v1471, 2
    %v1473 = vmax.f32 %v1471, %v1472
    %v1474 = vrot.slane %v1473, 1
    %v1475 = vmax.f32 %v1473, %v1474
    %v1476 = vpack.c.bf16 %v1426, %v1426
    %v1477 = vpack.c.bf16 %v1433, %v1433
    %v1478 = vpack.c.bf16 %v1440, %v1440
    %v1479 = vpack.c.bf16 %v1447, %v1447
    %v1480 = vpack.c.bf16 %v1454, %v1454
    %v1481 = vpack.c.bf16 %v1461, %v1461
    %v1482 = vpack.c.bf16 %v1468, %v1468
    %v1483 = vpack.c.bf16 %v1475, %v1475
    %v1484 = vld [vmem:[%s3] sm:$0xff]
    %v1485 = vld [vmem:[%s3 + $0x8] sm:$0xff]
    %v1486 = vld [vmem:[%s3 + $0x10] sm:$0xff]
    %v1487 = vld [vmem:[%s3 + $0x18] sm:$0xff]
    %v1488 = vld [vmem:[%s3 + $0x20] sm:$0xff]
    %v1489 = vld [vmem:[%s3 + $0x28] sm:$0xff]
    %v1490 = vld [vmem:[%s3 + $0x30] sm:$0xff]
    %v1491 = vld [vmem:[%s3 + $0x38] sm:$0xff]
    %v1492 = vld [vmem:[%s3 + $0x40] sm:$0xff]
    %v1493 = vld [vmem:[%s3 + $0x48] sm:$0xff]
    %v1494 = vld [vmem:[%s3 + $0x50] sm:$0xff]
    %v1495 = vld [vmem:[%s3 + $0x58] sm:$0xff]
    %v1496 = vld [vmem:[%s3 + $0x60] sm:$0xff]
    %v1497 = vld [vmem:[%s3 + $0x68] sm:$0xff]
    %v1498 = vld [vmem:[%s3 + $0x70] sm:$0xff]
    %v1499 = vld [vmem:[%s3 + $0x78] sm:$0xff]
    %v1500 = vld [vmem:[%s3 + $0x80] sm:$0xff]
    %v1501 = vld [vmem:[%s3 + $0x88] sm:$0xff]
    %v1502 = vld [vmem:[%s3 + $0x90] sm:$0xff]
    %v1503 = vld [vmem:[%s3 + $0x98] sm:$0xff]
    %v1504 = vld [vmem:[%s3 + $0xa0] sm:$0xff]
    %v1505 = vld [vmem:[%s3 + $0xa8] sm:$0xff]
    %v1506 = vld [vmem:[%s3 + $0xb0] sm:$0xff]
    %v1507 = vld [vmem:[%s3 + $0xb8] sm:$0xff]
    %v1508 = vld [vmem:[%s3 + $0xc0] sm:$0xff]
    %v1509 = vld [vmem:[%s3 + $0xc8] sm:$0xff]
    %v1510 = vld [vmem:[%s3 + $0xd0] sm:$0xff]
    %v1511 = vld [vmem:[%s3 + $0xd8] sm:$0xff]
    %v1512 = vld [vmem:[%s3 + $0xe0] sm:$0xff]
    %v1513 = vld [vmem:[%s3 + $0xe8] sm:$0xff]
    %v1514 = vld [vmem:[%s3 + $0xf0] sm:$0xff]
    %v1515 = vld [vmem:[%s3 + $0xf8] sm:$0xff]
    %v1516 = vld [vmem:[%s3 + $0x100] sm:$0xff]
    %v1517 = vld [vmem:[%s3 + $0x108] sm:$0xff]
    %v1518 = vld [vmem:[%s3 + $0x110] sm:$0xff]
    %v1519 = vld [vmem:[%s3 + $0x118] sm:$0xff]
    %v1520 = vld [vmem:[%s3 + $0x120] sm:$0xff]
    %v1521 = vld [vmem:[%s3 + $0x128] sm:$0xff]
    %v1522 = vld [vmem:[%s3 + $0x130] sm:$0xff]
    %v1523 = vld [vmem:[%s3 + $0x138] sm:$0xff]
    %v1524 = vld [vmem:[%s3 + $0x140] sm:$0xff]
    %v1525 = vld [vmem:[%s3 + $0x148] sm:$0xff]
    %v1526 = vld [vmem:[%s3 + $0x150] sm:$0xff]
    %v1527 = vld [vmem:[%s3 + $0x158] sm:$0xff]
    %v1528 = vld [vmem:[%s3 + $0x160] sm:$0xff]
    %v1529 = vld [vmem:[%s3 + $0x168] sm:$0xff]
    %v1530 = vld [vmem:[%s3 + $0x170] sm:$0xff]
    %v1531 = vld [vmem:[%s3 + $0x178] sm:$0xff]
    %v1532 = vld [vmem:[%s3 + $0x180] sm:$0xff]
    %v1533 = vld [vmem:[%s3 + $0x188] sm:$0xff]
    %v1534 = vld [vmem:[%s3 + $0x190] sm:$0xff]
    %v1535 = vld [vmem:[%s3 + $0x198] sm:$0xff]
    %v1536 = vld [vmem:[%s3 + $0x1a0] sm:$0xff]
    %v1537 = vld [vmem:[%s3 + $0x1a8] sm:$0xff]
    %v1538 = vld [vmem:[%s3 + $0x1b0] sm:$0xff]
    %v1539 = vld [vmem:[%s3 + $0x1b8] sm:$0xff]
    %v1540 = vld [vmem:[%s3 + $0x1c0] sm:$0xff]
    %v1541 = vld [vmem:[%s3 + $0x1c8] sm:$0xff]
    %v1542 = vld [vmem:[%s3 + $0x1d0] sm:$0xff]
    %v1543 = vld [vmem:[%s3 + $0x1d8] sm:$0xff]
    %v1544 = vld [vmem:[%s3 + $0x1e0] sm:$0xff]
    %v1545 = vld [vmem:[%s3 + $0x1e8] sm:$0xff]
    %v1546 = vld [vmem:[%s3 + $0x1f0] sm:$0xff]
    %v1547 = vld [vmem:[%s3 + $0x1f8] sm:$0xff]
    %v1548 = vld [vmem:[%s4] sm:$0xf]
    %v1550 = vlaneseq
    %v1551 = vshrl.u32 %v1550, 7
    %v1552 = vsub.s32 0, %v1551
    %v1553 = vrot.slane %v1548, %v1552
    %v1554 = vlaneseq
    %v1555 = vshrl.u32 %v1554, 7
    %v1556 = vsub.s32 1, %v1555
    %v1557 = vrot.slane %v1548, %v1556
    %v1558 = vlaneseq
    %v1559 = vshrl.u32 %v1558, 7
    %v1560 = vsub.s32 2, %v1559
    %v1561 = vrot.slane %v1548, %v1560
    %v1562 = vlaneseq
    %v1563 = vshrl.u32 %v1562, 7
    %v1564 = vsub.s32 3, %v1563
    %v1565 = vrot.slane %v1548, %v1564
    %v1578 = vunpack.c.l.b16 %v1476
    %v1579 = vunpack.c.l.b16 %v1477
    %v1580 = vunpack.c.l.b16 %v1478
    %v1581 = vunpack.c.l.b16 %v1479
    %v1582 = vunpack.c.l.b16 %v1480
    %v1583 = vunpack.c.l.b16 %v1481
    %v1584 = vunpack.c.l.b16 %v1482
    %v1585 = vunpack.c.l.b16 %v1483
    %vm1586 = vcmask 1041409
    %v1587 = vsel %vm1586, %v1580, %v1578
    %vm1588 = vcmask 1042434
    %v1589 = vsel %vm1588, %v1582, %v1587
    %vm1590 = vcmask 1043459
    %v1591 = vsel %vm1590, %v1584, %v1589
    %v1592 = vsel %vm1586, %v1581, %v1579
    %v1593 = vsel %vm1588, %v1583, %v1592
    %v1594 = vsel %vm1590, %v1585, %v1593
    %v1595 = vpack.c.b16 %v1591, %v1591
    %v1596 = vpack.c.b16 %v1594, %v1594
    %v1663 = vunpack.c.l.b16 %v1484
    %v1664 = vunpack.c.h.b16 %v1484
    %v1665 = vunpack.c.l.b16 %v1485
    %v1666 = vunpack.c.h.b16 %v1485
    %v1667 = vunpack.c.l.b16 %v1486
    %v1668 = vunpack.c.h.b16 %v1486
    %v1669 = vunpack.c.l.b16 %v1487
    %v1670 = vunpack.c.h.b16 %v1487
    %v1671 = vunpack.c.l.b16 %v1488
    %v1672 = vunpack.c.h.b16 %v1488
    %v1673 = vunpack.c.l.b16 %v1489
    %v1674 = vunpack.c.h.b16 %v1489
    %v1675 = vunpack.c.l.b16 %v1490
    %v1676 = vunpack.c.h.b16 %v1490
    %v1677 = vunpack.c.l.b16 %v1491
    %v1678 = vunpack.c.h.b16 %v1491
    %v1679 = vunpack.c.l.b16 %v1492
    %v1680 = vunpack.c.h.b16 %v1492
    %v1681 = vunpack.c.l.b16 %v1493
    %v1682 = vunpack.c.h.b16 %v1493
    %v1683 = vunpack.c.l.b16 %v1494
    %v1684 = vunpack.c.h.b16 %v1494
    %v1685 = vunpack.c.l.b16 %v1495
    %v1686 = vunpack.c.h.b16 %v1495
    %v1687 = vunpack.c.l.b16 %v1496
    %v1688 = vunpack.c.h.b16 %v1496
    %v1689 = vunpack.c.l.b16 %v1497
    %v1690 = vunpack.c.h.b16 %v1497
    %v1691 = vunpack.c.l.b16 %v1498
    %v1692 = vunpack.c.h.b16 %v1498
    %v1693 = vunpack.c.l.b16 %v1499
    %v1694 = vunpack.c.h.b16 %v1499
    %v1695 = vunpack.c.l.b16 %v1500
    %v1696 = vunpack.c.h.b16 %v1500
    %v1697 = vunpack.c.l.b16 %v1501
    %v1698 = vunpack.c.h.b16 %v1501
    %v1699 = vunpack.c.l.b16 %v1502
    %v1700 = vunpack.c.h.b16 %v1502
    %v1701 = vunpack.c.l.b16 %v1503
    %v1702 = vunpack.c.h.b16 %v1503
    %v1703 = vunpack.c.l.b16 %v1504
    %v1704 = vunpack.c.h.b16 %v1504
    %v1705 = vunpack.c.l.b16 %v1505
    %v1706 = vunpack.c.h.b16 %v1505
    %v1707 = vunpack.c.l.b16 %v1506
    %v1708 = vunpack.c.h.b16 %v1506
    %v1709 = vunpack.c.l.b16 %v1507
    %v1710 = vunpack.c.h.b16 %v1507
    %v1711 = vunpack.c.l.b16 %v1508
    %v1712 = vunpack.c.h.b16 %v1508
    %v1713 = vunpack.c.l.b16 %v1509
    %v1714 = vunpack.c.h.b16 %v1509
    %v1715 = vunpack.c.l.b16 %v1510
    %v1716 = vunpack.c.h.b16 %v1510
    %v1717 = vunpack.c.l.b16 %v1511
    %v1718 = vunpack.c.h.b16 %v1511
    %v1719 = vunpack.c.l.b16 %v1512
    %v1720 = vunpack.c.h.b16 %v1512
    %v1721 = vunpack.c.l.b16 %v1513
    %v1722 = vunpack.c.h.b16 %v1513
    %v1723 = vunpack.c.l.b16 %v1514
    %v1724 = vunpack.c.h.b16 %v1514
    %v1725 = vunpack.c.l.b16 %v1515
    %v1726 = vunpack.c.h.b16 %v1515
    %v1727 = vunpack.c.l.b16 %v1516
    %v1728 = vunpack.c.h.b16 %v1516
    %v1729 = vunpack.c.l.b16 %v1517
    %v1730 = vunpack.c.h.b16 %v1517
    %v1731 = vunpack.c.l.b16 %v1518
    %v1732 = vunpack.c.h.b16 %v1518
    %v1733 = vunpack.c.l.b16 %v1519
    %v1734 = vunpack.c.h.b16 %v1519
    %v1735 = vunpack.c.l.b16 %v1520
    %v1736 = vunpack.c.h.b16 %v1520
    %v1737 = vunpack.c.l.b16 %v1521
    %v1738 = vunpack.c.h.b16 %v1521
    %v1739 = vunpack.c.l.b16 %v1522
    %v1740 = vunpack.c.h.b16 %v1522
    %v1741 = vunpack.c.l.b16 %v1523
    %v1742 = vunpack.c.h.b16 %v1523
    %v1743 = vunpack.c.l.b16 %v1524
    %v1744 = vunpack.c.h.b16 %v1524
    %v1745 = vunpack.c.l.b16 %v1525
    %v1746 = vunpack.c.h.b16 %v1525
    %v1747 = vunpack.c.l.b16 %v1526
    %v1748 = vunpack.c.h.b16 %v1526
    %v1749 = vunpack.c.l.b16 %v1527
    %v1750 = vunpack.c.h.b16 %v1527
    %v1751 = vunpack.c.l.b16 %v1528
    %v1752 = vunpack.c.h.b16 %v1528
    %v1753 = vunpack.c.l.b16 %v1529
    %v1754 = vunpack.c.h.b16 %v1529
    %v1755 = vunpack.c.l.b16 %v1530
    %v1756 = vunpack.c.h.b16 %v1530
    %v1757 = vunpack.c.l.b16 %v1531
    %v1758 = vunpack.c.h.b16 %v1531
    %v1759 = vunpack.c.l.b16 %v1532
    %v1760 = vunpack.c.h.b16 %v1532
    %v1761 = vunpack.c.l.b16 %v1533
    %v1762 = vunpack.c.h.b16 %v1533
    %v1763 = vunpack.c.l.b16 %v1534
    %v1764 = vunpack.c.h.b16 %v1534
    %v1765 = vunpack.c.l.b16 %v1535
    %v1766 = vunpack.c.h.b16 %v1535
    %v1767 = vunpack.c.l.b16 %v1536
    %v1768 = vunpack.c.h.b16 %v1536
    %v1769 = vunpack.c.l.b16 %v1537
    %v1770 = vunpack.c.h.b16 %v1537
    %v1771 = vunpack.c.l.b16 %v1538
    %v1772 = vunpack.c.h.b16 %v1538
    %v1773 = vunpack.c.l.b16 %v1539
    %v1774 = vunpack.c.h.b16 %v1539
    %v1775 = vunpack.c.l.b16 %v1540
    %v1776 = vunpack.c.h.b16 %v1540
    %v1777 = vunpack.c.l.b16 %v1541
    %v1778 = vunpack.c.h.b16 %v1541
    %v1779 = vunpack.c.l.b16 %v1542
    %v1780 = vunpack.c.h.b16 %v1542
    %v1781 = vunpack.c.l.b16 %v1543
    %v1782 = vunpack.c.h.b16 %v1543
    %v1783 = vunpack.c.l.b16 %v1544
    %v1784 = vunpack.c.h.b16 %v1544
    %v1785 = vunpack.c.l.b16 %v1545
    %v1786 = vunpack.c.h.b16 %v1545
    %v1787 = vunpack.c.l.b16 %v1546
    %v1788 = vunpack.c.h.b16 %v1546
    %v1789 = vunpack.c.l.b16 %v1547
    %v1790 = vunpack.c.h.b16 %v1547
    %v1791 = vpack.c.b16 %v1667, %v1663
    %v1792 = vpack.c.b16 %v1668, %v1664
    %v1793 = vpack.c.b16 %v1669, %v1665
    %v1794 = vpack.c.b16 %v1670, %v1666
    %v1795 = vpack.c.b16 %v1675, %v1671
    %v1796 = vpack.c.b16 %v1676, %v1672
    %v1797 = vpack.c.b16 %v1677, %v1673
    %v1798 = vpack.c.b16 %v1678, %v1674
    %v1799 = vpack.c.b16 %v1683, %v1679
    %v1800 = vpack.c.b16 %v1684, %v1680
    %v1801 = vpack.c.b16 %v1685, %v1681
    %v1802 = vpack.c.b16 %v1686, %v1682
    %v1803 = vpack.c.b16 %v1691, %v1687
    %v1804 = vpack.c.b16 %v1692, %v1688
    %v1805 = vpack.c.b16 %v1693, %v1689
    %v1806 = vpack.c.b16 %v1694, %v1690
    %v1807 = vpack.c.b16 %v1699, %v1695
    %v1808 = vpack.c.b16 %v1700, %v1696
    %v1809 = vpack.c.b16 %v1701, %v1697
    %v1810 = vpack.c.b16 %v1702, %v1698
    %v1811 = vpack.c.b16 %v1707, %v1703
    %v1812 = vpack.c.b16 %v1708, %v1704
    %v1813 = vpack.c.b16 %v1709, %v1705
    %v1814 = vpack.c.b16 %v1710, %v1706
    %v1815 = vpack.c.b16 %v1715, %v1711
    %v1816 = vpack.c.b16 %v1716, %v1712
    %v1817 = vpack.c.b16 %v1717, %v1713
    %v1818 = vpack.c.b16 %v1718, %v1714
    %v1819 = vpack.c.b16 %v1723, %v1719
    %v1820 = vpack.c.b16 %v1724, %v1720
    %v1821 = vpack.c.b16 %v1725, %v1721
    %v1822 = vpack.c.b16 %v1726, %v1722
    %v1823 = vpack.c.b16 %v1731, %v1727
    %v1824 = vpack.c.b16 %v1732, %v1728
    %v1825 = vpack.c.b16 %v1733, %v1729
    %v1826 = vpack.c.b16 %v1734, %v1730
    %v1827 = vpack.c.b16 %v1739, %v1735
    %v1828 = vpack.c.b16 %v1740, %v1736
    %v1829 = vpack.c.b16 %v1741, %v1737
    %v1830 = vpack.c.b16 %v1742, %v1738
    %v1831 = vpack.c.b16 %v1747, %v1743
    %v1832 = vpack.c.b16 %v1748, %v1744
    %v1833 = vpack.c.b16 %v1749, %v1745
    %v1834 = vpack.c.b16 %v1750, %v1746
    %v1835 = vpack.c.b16 %v1755, %v1751
    %v1836 = vpack.c.b16 %v1756, %v1752
    %v1837 = vpack.c.b16 %v1757, %v1753
    %v1838 = vpack.c.b16 %v1758, %v1754
    %v1839 = vpack.c.b16 %v1763, %v1759
    %v1840 = vpack.c.b16 %v1764, %v1760
    %v1841 = vpack.c.b16 %v1765, %v1761
    %v1842 = vpack.c.b16 %v1766, %v1762
    %v1843 = vpack.c.b16 %v1771, %v1767
    %v1844 = vpack.c.b16 %v1772, %v1768
    %v1845 = vpack.c.b16 %v1773, %v1769
    %v1846 = vpack.c.b16 %v1774, %v1770
    %v1847 = vpack.c.b16 %v1779, %v1775
    %v1848 = vpack.c.b16 %v1780, %v1776
    %v1849 = vpack.c.b16 %v1781, %v1777
    %v1850 = vpack.c.b16 %v1782, %v1778
    %v1851 = vpack.c.b16 %v1787, %v1783
    %v1852 = vpack.c.b16 %v1788, %v1784
    %v1853 = vpack.c.b16 %v1789, %v1785
    %v1854 = vpack.c.b16 %v1790, %v1786
    %1919 = vmatprep.subr.bf16.mxu0 %v1820
    %1920 = vmatpush1.bf16.msra.mxu0 %v1819
    %1921 = vmatprep.subr.bf16.mxu0 %v1816
    %1922 = vmatpush1.bf16.msra.mxu0 %v1815
    %1923 = vmatprep.subr.bf16.mxu0 %v1812
    %1924 = vmatpush1.bf16.msra.mxu0 %v1811
    %1925 = vmatprep.subr.bf16.mxu0 %v1808
    %1926 = vmatpush1.bf16.msra.mxu0 %v1807
    %1927 = vmatprep.subr.bf16.mxu0 %v1804
    %1928 = vmatpush1.bf16.msra.mxu0 %v1803
    %1929 = vmatprep.subr.bf16.mxu0 %v1800
    %1930 = vmatpush1.bf16.msra.mxu0 %v1799
    %1931 = vmatprep.subr.bf16.mxu0 %v1796
    %1932 = vmatpush1.bf16.msra.mxu0 %v1795
    %1933 = vmatprep.subr.bf16.mxu0 %v1792
    %1934 = vmatpush1.bf16.msra.mxu0 %v1791
    %1935 = vmatprep.subr.bf16.mxu0 %v1852
    %1936 = vmatpush2.bf16.msra.mxu0 %v1851
    %1937 = vmatprep.subr.bf16.mxu0 %v1848
    %1938 = vmatpush2.bf16.msra.mxu0 %v1847
    %1939 = vmatprep.subr.bf16.mxu0 %v1844
    %1940 = vmatpush2.bf16.msra.mxu0 %v1843
    %1941 = vmatprep.subr.bf16.mxu0 %v1840
    %1942 = vmatpush2.bf16.msra.mxu0 %v1839
    %1943 = vmatprep.subr.bf16.mxu0 %v1836
    %1944 = vmatpush2.bf16.msra.mxu0 %v1835
    %1945 = vmatprep.subr.bf16.mxu0 %v1832
    %1946 = vmatpush2.bf16.msra.mxu0 %v1831
    %1947 = vmatprep.subr.bf16.mxu0 %v1828
    %1948 = vmatpush2.bf16.msra.mxu0 %v1827
    %1949 = vmatprep.subr.bf16.mxu0 %v1824
    %1950 = vmatpush2.bf16.msra.mxu0 %v1823
    %1951 = vmatprep.mubr.bf16.mxu0 %v1596
    %1952 = vmatmul.mubr.bf16.gmra.mxu0 %v1595
    %v1953 = vpop.f32.mrf.mxu0
    %v1954 = vadd.f32 %v1553, %v1953
    %v1955 = vpop.f32.mrf.mxu0
    %v1956 = vadd.f32 %v1557, %v1955
    %v1957 = vpop.f32.mrf.mxu0
    %v1958 = vpop.f32.mrf.mxu0
    %1959 = vdwg.mxu0
    %1960 = vmatprep.subr.bf16.mxu0 %v1822
    %1961 = vmatpush1.bf16.msra.mxu0 %v1821
    %1962 = vmatprep.subr.bf16.mxu0 %v1818
    %1963 = vmatpush1.bf16.msra.mxu0 %v1817
    %1964 = vmatprep.subr.bf16.mxu0 %v1814
    %1965 = vmatpush1.bf16.msra.mxu0 %v1813
    %1966 = vmatprep.subr.bf16.mxu0 %v1810
    %1967 = vmatpush1.bf16.msra.mxu0 %v1809
    %1968 = vmatprep.subr.bf16.mxu0 %v1806
    %1969 = vmatpush1.bf16.msra.mxu0 %v1805
    %1970 = vmatprep.subr.bf16.mxu0 %v1802
    %1971 = vmatpush1.bf16.msra.mxu0 %v1801
    %1972 = vmatprep.subr.bf16.mxu0 %v1798
    %1973 = vmatpush1.bf16.msra.mxu0 %v1797
    %1974 = vmatprep.subr.bf16.mxu0 %v1794
    %1975 = vmatpush1.bf16.msra.mxu0 %v1793
    %1976 = vmatprep.subr.bf16.mxu0 %v1854
    %1977 = vmatpush2.bf16.msra.mxu0 %v1853
    %1978 = vmatprep.subr.bf16.mxu0 %v1850
    %1979 = vmatpush2.bf16.msra.mxu0 %v1849
    %1980 = vmatprep.subr.bf16.mxu0 %v1846
    %1981 = vmatpush2.bf16.msra.mxu0 %v1845
    %1982 = vmatprep.subr.bf16.mxu0 %v1842
    %1983 = vmatpush2.bf16.msra.mxu0 %v1841
    %1984 = vmatprep.subr.bf16.mxu0 %v1838
    %1985 = vmatpush2.bf16.msra.mxu0 %v1837
    %1986 = vmatprep.subr.bf16.mxu0 %v1834
    %1987 = vmatpush2.bf16.msra.mxu0 %v1833
    %1988 = vmatprep.subr.bf16.mxu0 %v1830
    %1989 = vmatpush2.bf16.msra.mxu0 %v1829
    %1990 = vmatprep.subr.bf16.mxu0 %v1826
    %1991 = vmatpush2.bf16.msra.mxu0 %v1825
    %1992 = vmatprep.mubr.bf16.mxu0 %v1596
    %1993 = vmatmul.mubr.bf16.gmra.mxu0 %v1595
    %v1994 = vpop.f32.mrf.mxu0
    %v1995 = vadd.f32 %v1561, %v1994
    %v1996 = vpop.f32.mrf.mxu0
    %v1997 = vadd.f32 %v1565, %v1996
    %v1998 = vpop.f32.mrf.mxu0
    %v1999 = vpop.f32.mrf.mxu0
    %2000 = vdwg.mxu0
    %vm2001 = vcmp.gt.f32.partialorder %v1954, 0.0
    %vm2002 = vcmp.gt.f32.partialorder %v1956, 0.0
    %vm2003 = vcmp.gt.f32.partialorder %v1995, 0.0
    %vm2004 = vcmp.gt.f32.partialorder %v1997, 0.0
    %v2005 = vmul.f32 %v1954, 0.01
    %v2006 = vmul.f32 %v1956, 0.01
    %v2007 = vmul.f32 %v1995, 0.01
    %v2008 = vmul.f32 %v1997, 0.01
    %v2009 = vsel %vm2001, %v1954, %v2005
    %v2010 = vsel %vm2002, %v1956, %v2006
    %v2011 = vsel %vm2003, %v1995, %v2007
    %v2012 = vsel %vm2004, %v1997, %v2008
    %v2013 = vpack.c.bf16 %v2009, %v2009
    %v2014 = vpack.c.bf16 %v2010, %v2010
    %v2015 = vpack.c.bf16 %v2011, %v2011
    %v2016 = vpack.c.bf16 %v2012, %v2012
    %v2017 = vld [vmem:[#allocation5] sm:$0xff]
    %v2018 = vld [vmem:[#allocation5 + $0x8] sm:$0xff]
    %v2019 = vld [vmem:[#allocation5 + $0x10] sm:$0xff]
    %v2020 = vld [vmem:[#allocation5 + $0x18] sm:$0xff]
    %v2021 = vld [vmem:[#allocation5 + $0x20] sm:$0xff]
    %v2022 = vld [vmem:[#allocation5 + $0x28] sm:$0xff]
    %v2023 = vld [vmem:[#allocation5 + $0x30] sm:$0xff]
    %v2024 = vld [vmem:[#allocation5 + $0x38] sm:$0xff]
    %v2025 = vld [vmem:[#allocation5 + $0x40] sm:$0xff]
    %v2026 = vld [vmem:[#allocation5 + $0x48] sm:$0xff]
    %v2027 = vld [vmem:[#allocation5 + $0x50] sm:$0xff]
    %v2028 = vld [vmem:[#allocation5 + $0x58] sm:$0xff]
    %v2029 = vld [vmem:[#allocation5 + $0x60] sm:$0xff]
    %v2030 = vld [vmem:[#allocation5 + $0x68] sm:$0xff]
    %v2031 = vld [vmem:[#allocation5 + $0x70] sm:$0xff]
    %v2032 = vld [vmem:[#allocation5 + $0x78] sm:$0xff]
    %v2033 = vld [vmem:[#allocation5 + $0x80] sm:$0xff]
    %v2034 = vld [vmem:[#allocation5 + $0x88] sm:$0xff]
    %v2035 = vld [vmem:[#allocation5 + $0x90] sm:$0xff]
    %v2036 = vld [vmem:[#allocation5 + $0x98] sm:$0xff]
    %v2037 = vld [vmem:[#allocation5 + $0xa0] sm:$0xff]
    %v2038 = vld [vmem:[#allocation5 + $0xa8] sm:$0xff]
    %v2039 = vld [vmem:[#allocation5 + $0xb0] sm:$0xff]
    %v2040 = vld [vmem:[#allocation5 + $0xb8] sm:$0xff]
    %v2041 = vld [vmem:[#allocation5 + $0xc0] sm:$0xff]
    %v2042 = vld [vmem:[#allocation5 + $0xc8] sm:$0xff]
    %v2043 = vld [vmem:[#allocation5 + $0xd0] sm:$0xff]
    %v2044 = vld [vmem:[#allocation5 + $0xd8] sm:$0xff]
    %v2045 = vld [vmem:[#allocation5 + $0xe0] sm:$0xff]
    %v2046 = vld [vmem:[#allocation5 + $0xe8] sm:$0xff]
    %v2047 = vld [vmem:[#allocation5 + $0xf0] sm:$0xff]
    %v2048 = vld [vmem:[#allocation5 + $0xf8] sm:$0xff]
    %v2049 = vld [vmem:[#allocation5 + $0x100] sm:$0xff]
    %v2050 = vld [vmem:[#allocation5 + $0x108] sm:$0xff]
    %v2051 = vld [vmem:[#allocation5 + $0x110] sm:$0xff]
    %v2052 = vld [vmem:[#allocation5 + $0x118] sm:$0xff]
    %v2053 = vld [vmem:[#allocation5 + $0x120] sm:$0xff]
    %v2054 = vld [vmem:[#allocation5 + $0x128] sm:$0xff]
    %v2055 = vld [vmem:[#allocation5 + $0x130] sm:$0xff]
    %v2056 = vld [vmem:[#allocation5 + $0x138] sm:$0xff]
    %v2057 = vld [vmem:[#allocation5 + $0x140] sm:$0xff]
    %v2058 = vld [vmem:[#allocation5 + $0x148] sm:$0xff]
    %v2059 = vld [vmem:[#allocation5 + $0x150] sm:$0xff]
    %v2060 = vld [vmem:[#allocation5 + $0x158] sm:$0xff]
    %v2061 = vld [vmem:[#allocation5 + $0x160] sm:$0xff]
    %v2062 = vld [vmem:[#allocation5 + $0x168] sm:$0xff]
    %v2063 = vld [vmem:[#allocation5 + $0x170] sm:$0xff]
    %v2064 = vld [vmem:[#allocation5 + $0x178] sm:$0xff]
    %v2065 = vld [vmem:[#allocation5 + $0x180] sm:$0xff]
    %v2066 = vld [vmem:[#allocation5 + $0x188] sm:$0xff]
    %v2067 = vld [vmem:[#allocation5 + $0x190] sm:$0xff]
    %v2068 = vld [vmem:[#allocation5 + $0x198] sm:$0xff]
    %v2069 = vld [vmem:[#allocation5 + $0x1a0] sm:$0xff]
    %v2070 = vld [vmem:[#allocation5 + $0x1a8] sm:$0xff]
    %v2071 = vld [vmem:[#allocation5 + $0x1b0] sm:$0xff]
    %v2072 = vld [vmem:[#allocation5 + $0x1b8] sm:$0xff]
    %v2073 = vld [vmem:[#allocation5 + $0x1c0] sm:$0xff]
    %v2074 = vld [vmem:[#allocation5 + $0x1c8] sm:$0xff]
    %v2075 = vld [vmem:[#allocation5 + $0x1d0] sm:$0xff]
    %v2076 = vld [vmem:[#allocation5 + $0x1d8] sm:$0xff]
    %v2077 = vld [vmem:[#allocation5 + $0x1e0] sm:$0xff]
    %v2078 = vld [vmem:[#allocation5 + $0x1e8] sm:$0xff]
    %v2079 = vld [vmem:[#allocation5 + $0x1f0] sm:$0xff]
    %v2080 = vld [vmem:[#allocation5 + $0x1f8] sm:$0xff]
    %v2081 = vld [vmem:[%s6] sm:$0x3]
    %v2083 = vlaneseq
    %v2084 = vshrl.u32 %v2083, 7
    %v2085 = vsub.s32 0, %v2084
    %v2086 = vrot.slane %v2081, %v2085
    %v2087 = vlaneseq
    %v2088 = vshrl.u32 %v2087, 7
    %v2089 = vsub.s32 1, %v2088
    %v2090 = vrot.slane %v2081, %v2089
    %v2157 = vunpack.c.l.b16 %v2017
    %v2158 = vunpack.c.h.b16 %v2017
    %v2159 = vunpack.c.l.b16 %v2018
    %v2160 = vunpack.c.h.b16 %v2018
    %v2161 = vunpack.c.l.b16 %v2019
    %v2162 = vunpack.c.h.b16 %v2019
    %v2163 = vunpack.c.l.b16 %v2020
    %v2164 = vunpack.c.h.b16 %v2020
    %v2165 = vunpack.c.l.b16 %v2021
    %v2166 = vunpack.c.h.b16 %v2021
    %v2167 = vunpack.c.l.b16 %v2022
    %v2168 = vunpack.c.h.b16 %v2022
    %v2169 = vunpack.c.l.b16 %v2023
    %v2170 = vunpack.c.h.b16 %v2023
    %v2171 = vunpack.c.l.b16 %v2024
    %v2172 = vunpack.c.h.b16 %v2024
    %v2173 = vunpack.c.l.b16 %v2025
    %v2174 = vunpack.c.h.b16 %v2025
    %v2175 = vunpack.c.l.b16 %v2026
    %v2176 = vunpack.c.h.b16 %v2026
    %v2177 = vunpack.c.l.b16 %v2027
    %v2178 = vunpack.c.h.b16 %v2027
    %v2179 = vunpack.c.l.b16 %v2028
    %v2180 = vunpack.c.h.b16 %v2028
    %v2181 = vunpack.c.l.b16 %v2029
    %v2182 = vunpack.c.h.b16 %v2029
    %v2183 = vunpack.c.l.b16 %v2030
    %v2184 = vunpack.c.h.b16 %v2030
    %v2185 = vunpack.c.l.b16 %v2031
    %v2186 = vunpack.c.h.b16 %v2031
    %v2187 = vunpack.c.l.b16 %v2032
    %v2188 = vunpack.c.h.b16 %v2032
    %v2189 = vunpack.c.l.b16 %v2033
    %v2190 = vunpack.c.h.b16 %v2033
    %v2191 = vunpack.c.l.b16 %v2034
    %v2192 = vunpack.c.h.b16 %v2034
    %v2193 = vunpack.c.l.b16 %v2035
    %v2194 = vunpack.c.h.b16 %v2035
    %v2195 = vunpack.c.l.b16 %v2036
    %v2196 = vunpack.c.h.b16 %v2036
    %v2197 = vunpack.c.l.b16 %v2037
    %v2198 = vunpack.c.h.b16 %v2037
    %v2199 = vunpack.c.l.b16 %v2038
    %v2200 = vunpack.c.h.b16 %v2038
    %v2201 = vunpack.c.l.b16 %v2039
    %v2202 = vunpack.c.h.b16 %v2039
    %v2203 = vunpack.c.l.b16 %v2040
    %v2204 = vunpack.c.h.b16 %v2040
    %v2205 = vunpack.c.l.b16 %v2041
    %v2206 = vunpack.c.h.b16 %v2041
    %v2207 = vunpack.c.l.b16 %v2042
    %v2208 = vunpack.c.h.b16 %v2042
    %v2209 = vunpack.c.l.b16 %v2043
    %v2210 = vunpack.c.h.b16 %v2043
    %v2211 = vunpack.c.l.b16 %v2044
    %v2212 = vunpack.c.h.b16 %v2044
    %v2213 = vunpack.c.l.b16 %v2045
    %v2214 = vunpack.c.h.b16 %v2045
    %v2215 = vunpack.c.l.b16 %v2046
    %v2216 = vunpack.c.h.b16 %v2046
    %v2217 = vunpack.c.l.b16 %v2047
    %v2218 = vunpack.c.h.b16 %v2047
    %v2219 = vunpack.c.l.b16 %v2048
    %v2220 = vunpack.c.h.b16 %v2048
    %v2221 = vunpack.c.l.b16 %v2049
    %v2222 = vunpack.c.h.b16 %v2049
    %v2223 = vunpack.c.l.b16 %v2050
    %v2224 = vunpack.c.h.b16 %v2050
    %v2225 = vunpack.c.l.b16 %v2051
    %v2226 = vunpack.c.h.b16 %v2051
    %v2227 = vunpack.c.l.b16 %v2052
    %v2228 = vunpack.c.h.b16 %v2052
    %v2229 = vunpack.c.l.b16 %v2053
    %v2230 = vunpack.c.h.b16 %v2053
    %v2231 = vunpack.c.l.b16 %v2054
    %v2232 = vunpack.c.h.b16 %v2054
    %v2233 = vunpack.c.l.b16 %v2055
    %v2234 = vunpack.c.h.b16 %v2055
    %v2235 = vunpack.c.l.b16 %v2056
    %v2236 = vunpack.c.h.b16 %v2056
    %v2237 = vunpack.c.l.b16 %v2057
    %v2238 = vunpack.c.h.b16 %v2057
    %v2239 = vunpack.c.l.b16 %v2058
    %v2240 = vunpack.c.h.b16 %v2058
    %v2241 = vunpack.c.l.b16 %v2059
    %v2242 = vunpack.c.h.b16 %v2059
    %v2243 = vunpack.c.l.b16 %v2060
    %v2244 = vunpack.c.h.b16 %v2060
    %v2245 = vunpack.c.l.b16 %v2061
    %v2246 = vunpack.c.h.b16 %v2061
    %v2247 = vunpack.c.l.b16 %v2062
    %v2248 = vunpack.c.h.b16 %v2062
    %v2249 = vunpack.c.l.b16 %v2063
    %v2250 = vunpack.c.h.b16 %v2063
    %v2251 = vunpack.c.l.b16 %v2064
    %v2252 = vunpack.c.h.b16 %v2064
    %v2253 = vunpack.c.l.b16 %v2065
    %v2254 = vunpack.c.h.b16 %v2065
    %v2255 = vunpack.c.l.b16 %v2066
    %v2256 = vunpack.c.h.b16 %v2066
    %v2257 = vunpack.c.l.b16 %v2067
    %v2258 = vunpack.c.h.b16 %v2067
    %v2259 = vunpack.c.l.b16 %v2068
    %v2260 = vunpack.c.h.b16 %v2068
    %v2261 = vunpack.c.l.b16 %v2069
    %v2262 = vunpack.c.h.b16 %v2069
    %v2263 = vunpack.c.l.b16 %v2070
    %v2264 = vunpack.c.h.b16 %v2070
    %v2265 = vunpack.c.l.b16 %v2071
    %v2266 = vunpack.c.h.b16 %v2071
    %v2267 = vunpack.c.l.b16 %v2072
    %v2268 = vunpack.c.h.b16 %v2072
    %v2269 = vunpack.c.l.b16 %v2073
    %v2270 = vunpack.c.h.b16 %v2073
    %v2271 = vunpack.c.l.b16 %v2074
    %v2272 = vunpack.c.h.b16 %v2074
    %v2273 = vunpack.c.l.b16 %v2075
    %v2274 = vunpack.c.h.b16 %v2075
    %v2275 = vunpack.c.l.b16 %v2076
    %v2276 = vunpack.c.h.b16 %v2076
    %v2277 = vunpack.c.l.b16 %v2077
    %v2278 = vunpack.c.h.b16 %v2077
    %v2279 = vunpack.c.l.b16 %v2078
    %v2280 = vunpack.c.h.b16 %v2078
    %v2281 = vunpack.c.l.b16 %v2079
    %v2282 = vunpack.c.h.b16 %v2079
    %v2283 = vunpack.c.l.b16 %v2080
    %v2284 = vunpack.c.h.b16 %v2080
    %v2285 = vpack.c.b16 %v2159, %v2157
    %v2286 = vpack.c.b16 %v2160, %v2158
    %v2287 = vpack.c.b16 %v2163, %v2161
    %v2288 = vpack.c.b16 %v2164, %v2162
    %v2289 = vpack.c.b16 %v2167, %v2165
    %v2290 = vpack.c.b16 %v2168, %v2166
    %v2291 = vpack.c.b16 %v2171, %v2169
    %v2292 = vpack.c.b16 %v2172, %v2170
    %v2293 = vpack.c.b16 %v2175, %v2173
    %v2294 = vpack.c.b16 %v2176, %v2174
    %v2295 = vpack.c.b16 %v2179, %v2177
    %v2296 = vpack.c.b16 %v2180, %v2178
    %v2297 = vpack.c.b16 %v2183, %v2181
    %v2298 = vpack.c.b16 %v2184, %v2182
    %v2299 = vpack.c.b16 %v2187, %v2185
    %v2300 = vpack.c.b16 %v2188, %v2186
    %v2301 = vpack.c.b16 %v2191, %v2189
    %v2302 = vpack.c.b16 %v2192, %v2190
    %v2303 = vpack.c.b16 %v2195, %v2193
    %v2304 = vpack.c.b16 %v2196, %v2194
    %v2305 = vpack.c.b16 %v2199, %v2197
    %v2306 = vpack.c.b16 %v2200, %v2198
    %v2307 = vpack.c.b16 %v2203, %v2201
    %v2308 = vpack.c.b16 %v2204, %v2202
    %v2309 = vpack.c.b16 %v2207, %v2205
    %v2310 = vpack.c.b16 %v2208, %v2206
    %v2311 = vpack.c.b16 %v2211, %v2209
    %v2312 = vpack.c.b16 %v2212, %v2210
    %v2313 = vpack.c.b16 %v2215, %v2213
    %v2314 = vpack.c.b16 %v2216, %v2214
    %v2315 = vpack.c.b16 %v2219, %v2217
    %v2316 = vpack.c.b16 %v2220, %v2218
    %v2317 = vpack.c.b16 %v2223, %v2221
    %v2318 = vpack.c.b16 %v2224, %v2222
    %v2319 = vpack.c.b16 %v2227, %v2225
    %v2320 = vpack.c.b16 %v2228, %v2226
    %v2321 = vpack.c.b16 %v2231, %v2229
    %v2322 = vpack.c.b16 %v2232, %v2230
    %v2323 = vpack.c.b16 %v2235, %v2233
    %v2324 = vpack.c.b16 %v2236, %v2234
    %v2325 = vpack.c.b16 %v2239, %v2237
    %v2326 = vpack.c.b16 %v2240, %v2238
    %v2327 = vpack.c.b16 %v2243, %v2241
    %v2328 = vpack.c.b16 %v2244, %v2242
    %v2329 = vpack.c.b16 %v2247, %v2245
    %v2330 = vpack.c.b16 %v2248, %v2246
    %v2331 = vpack.c.b16 %v2251, %v2249
    %v2332 = vpack.c.b16 %v2252, %v2250
    %v2333 = vpack.c.b16 %v2255, %v2253
    %v2334 = vpack.c.b16 %v2256, %v2254
    %v2335 = vpack.c.b16 %v2259, %v2257
    %v2336 = vpack.c.b16 %v2260, %v2258
    %v2337 = vpack.c.b16 %v2263, %v2261
    %v2338 = vpack.c.b16 %v2264, %v2262
    %v2339 = vpack.c.b16 %v2267, %v2265
    %v2340 = vpack.c.b16 %v2268, %v2266
    %v2341 = vpack.c.b16 %v2271, %v2269
    %v2342 = vpack.c.b16 %v2272, %v2270
    %v2343 = vpack.c.b16 %v2275, %v2273
    %v2344 = vpack.c.b16 %v2276, %v2274
    %v2345 = vpack.c.b16 %v2279, %v2277
    %v2346 = vpack.c.b16 %v2280, %v2278
    %v2347 = vpack.c.b16 %v2283, %v2281
    %v2348 = vpack.c.b16 %v2284, %v2282
    %2413 = vmatprep.subr.bf16.mxu0 %v2300
    %2414 = vmatpush1.bf16.msra.mxu0 %v2299
    %2415 = vmatprep.subr.bf16.mxu0 %v2298
    %2416 = vmatpush1.bf16.msra.mxu0 %v2297
    %2417 = vmatprep.subr.bf16.mxu0 %v2296
    %2418 = vmatpush1.bf16.msra.mxu0 %v2295
    %2419 = vmatprep.subr.bf16.mxu0 %v2294
    %2420 = vmatpush1.bf16.msra.mxu0 %v2293
    %2421 = vmatprep.subr.bf16.mxu0 %v2292
    %2422 = vmatpush1.bf16.msra.mxu0 %v2291
    %2423 = vmatprep.subr.bf16.mxu0 %v2290
    %2424 = vmatpush1.bf16.msra.mxu0 %v2289
    %2425 = vmatprep.subr.bf16.mxu0 %v2288
    %2426 = vmatpush1.bf16.msra.mxu0 %v2287
    %2427 = vmatprep.subr.bf16.mxu0 %v2286
    %2428 = vmatpush1.bf16.msra.mxu0 %v2285
    %2429 = vmatprep.subr.bf16.mxu0 %v2316
    %2430 = vmatpush2.bf16.msra.mxu0 %v2315
    %2431 = vmatprep.subr.bf16.mxu0 %v2314
    %2432 = vmatpush2.bf16.msra.mxu0 %v2313
    %2433 = vmatprep.subr.bf16.mxu0 %v2312
    %2434 = vmatpush2.bf16.msra.mxu0 %v2311
    %2435 = vmatprep.subr.bf16.mxu0 %v2310
    %2436 = vmatpush2.bf16.msra.mxu0 %v2309
    %2437 = vmatprep.subr.bf16.mxu0 %v2308
    %2438 = vmatpush2.bf16.msra.mxu0 %v2307
    %2439 = vmatprep.subr.bf16.mxu0 %v2306
    %2440 = vmatpush2.bf16.msra.mxu0 %v2305
    %2441 = vmatprep.subr.bf16.mxu0 %v2304
    %2442 = vmatpush2.bf16.msra.mxu0 %v2303
    %2443 = vmatprep.subr.bf16.mxu0 %v2302
    %2444 = vmatpush2.bf16.msra.mxu0 %v2301
    %2445 = vmatprep.mubr.bf16.mxu0 %v2014
    %2446 = vmatmul.mubr.bf16.gmra.mxu0 %v2013
    %v2447 = vpop.f32.mrf.mxu0
    %v2448 = vadd.f32 %v2086, %v2447
    %v2449 = vpop.f32.mrf.mxu0
    %v2450 = vadd.f32 %v2090, %v2449
    %v2451 = vpop.f32.mrf.mxu0
    %v2452 = vpop.f32.mrf.mxu0
    %2453 = vdwg.mxu0
    %2454 = vmatprep.subr.bf16.mxu0 %v2332
    %2455 = vmatpush1.bf16.msra.mxu0 %v2331
    %2456 = vmatprep.subr.bf16.mxu0 %v2330
    %2457 = vmatpush1.bf16.msra.mxu0 %v2329
    %2458 = vmatprep.subr.bf16.mxu0 %v2328
    %2459 = vmatpush1.bf16.msra.mxu0 %v2327
    %2460 = vmatprep.subr.bf16.mxu0 %v2326
    %2461 = vmatpush1.bf16.msra.mxu0 %v2325
    %2462 = vmatprep.subr.bf16.mxu0 %v2324
    %2463 = vmatpush1.bf16.msra.mxu0 %v2323
    %2464 = vmatprep.subr.bf16.mxu0 %v2322
    %2465 = vmatpush1.bf16.msra.mxu0 %v2321
    %2466 = vmatprep.subr.bf16.mxu0 %v2320
    %2467 = vmatpush1.bf16.msra.mxu0 %v2319
    %2468 = vmatprep.subr.bf16.mxu0 %v2318
    %2469 = vmatpush1.bf16.msra.mxu0 %v2317
    %2470 = vmatprep.subr.bf16.mxu0 %v2348
    %2471 = vmatpush2.bf16.msra.mxu0 %v2347
    %2472 = vmatprep.subr.bf16.mxu0 %v2346
    %2473 = vmatpush2.bf16.msra.mxu0 %v2345
    %2474 = vmatprep.subr.bf16.mxu0 %v2344
    %2475 = vmatpush2.bf16.msra.mxu0 %v2343
    %2476 = vmatprep.subr.bf16.mxu0 %v2342
    %2477 = vmatpush2.bf16.msra.mxu0 %v2341
    %2478 = vmatprep.subr.bf16.mxu0 %v2340
    %2479 = vmatpush2.bf16.msra.mxu0 %v2339
    %2480 = vmatprep.subr.bf16.mxu0 %v2338
    %2481 = vmatpush2.bf16.msra.mxu0 %v2337
    %2482 = vmatprep.subr.bf16.mxu0 %v2336
    %2483 = vmatpush2.bf16.msra.mxu0 %v2335
    %2484 = vmatprep.subr.bf16.mxu0 %v2334
    %2485 = vmatpush2.bf16.msra.mxu0 %v2333
    %2486 = vmatprep.mubr.bf16.mxu0 %v2016
    %2487 = vmatmul.mubr.bf16.gmra.mxu0 %v2015
    %v2488 = vpop.f32.mrf.mxu0
    %v2489 = vadd.f32 %v2448, %v2488
    %v2490 = vpop.f32.mrf.mxu0
    %v2491 = vadd.f32 %v2450, %v2490
    %v2492 = vpop.f32.mrf.mxu0
    %v2493 = vpop.f32.mrf.mxu0
    %2494 = vdwg.mxu0
    %vm2495 = vcmp.gt.f32.partialorder %v2489, 0.0
    %vm2496 = vcmp.gt.f32.partialorder %v2491, 0.0
    %v2497 = vmul.f32 %v2489, 0.01
    %v2498 = vmul.f32 %v2491, 0.01
    %v2499 = vsel %vm2495, %v2489, %v2497
    %v2500 = vsel %vm2496, %v2491, %v2498
    %v2501 = vld [vmem:[%s7] sm:$0x3]
    %v2503 = vlaneseq
    %v2504 = vshrl.u32 %v2503, 7
    %v2505 = vsub.s32 0, %v2504
    %v2506 = vrot.slane %v2501, %v2505
    %v2507 = vlaneseq
    %v2508 = vshrl.u32 %v2507, 7
    %v2509 = vsub.s32 1, %v2508
    %v2510 = vrot.slane %v2501, %v2509
    %v2513 = vmul.f32 %v2499, %v2506
    %v2514 = vmul.f32 %v2500, %v2510
    %vm2515 = vcmask 1043456
    %v2516 = vsel %vm2515, %v2513, 0.0
    %v2517 = vsel %vm2515, %v2514, 0.0
    %v2518 = vadd.f32 %v2516, %v2517
    %2519 = vadd.xlane.f32.xlu0 %v2518
    %v2520 = vpop.xlane.xlu0 %2519
    %v2521 = vld [vmem:[#allocation2] sm:$0x1]
    %v2523 = vlaneseq
    %v2524 = vshrl.u32 %v2523, 7
    %v2525 = vsub.s32 0, %v2524
    %v2526 = vrot.slane %v2521, %v2525
    %v2528 = vadd.f32 %v2520, %v2526
    %v2529 = vxor.u32 %v2528, 2147483648
    %v2530 = vmul.f32 %v2529, 1.442695
    %v2531 = vpow.pop %v2530
    %v2532 = vadd.f32 %v2531, 1.0
    %v2533 = vrcp.pop %v2532
    %v2534 = vmul.f32 1.0, %v2533
    %2536 = vset.pattern.permute.xlu0 0
    %2537 = vperm.xlu0 %2536, %v2534
    %v2538 = vpop.permute.xlu0 %2537
    %2540 = vst [vmem:[%s9] sm:$0xf] %v2538
    // Predicated region
    $region46: #{forward.1} parent=1 // pred_check
      _
    $region47: #{forward.1} parent=1 // pred_check_branch
      %2542 = sbr.rel (0) target = $region49
    $region48: #{forward.1} parent=1 // pred_region
      _
    $region49: #{forward.1} parent=1 // pred_fallthru
      _
    // Predicated region
    $region50: #{forward.1} parent=1 // pred_check
      _
    $region51: #{forward.1} parent=1 // pred_check_branch
      %2544 = sbr.rel (0) target = $region53
    $region52: #{forward.1} parent=1 // pred_region
      _
    $region53: #{forward.1} parent=1 // pred_fallthru
      _
    %2545 = vsyncpa [#allocation4], 1
    %2546 = vsyncpa [#allocation6], 1

</llo_original>
